<compile_context>
chip_gen: v7x
topology: tpu7x:2x2x1
jax: 0.10.0
libtpu: 0.0.40
codegen_flags: <defaults>
</compile_context>

<pallas_src>
import math
from functools import partial

import jax
import jax.numpy as jnp
from jax.experimental import pallas as pl
from jax.experimental.pallas import tpu as pltpu

_TWO_PI = 2.0 * math.pi


def _round_up(x, m):
    return ((x + m - 1) // m) * m


# --------------------------------------------------------------------------
# Kernel: one row-tile, with `groups` original rows packed along lanes.
#   t_ref: (tm, groups)            -- packed times
#   w_ref: (1, half)               -- resident weights
#   o_ref: (tm, groups * dim_out)  -- per-group layout [t, sin(f), cos(f)]
# --------------------------------------------------------------------------
def _rfe_kernel(t_ref, w_ref, o_ref, *, groups, half, dim_out):
    w2pi = w_ref[...].astype(jnp.float32) * _TWO_PI            # (1, half)
    for j in range(groups):                                    # static unroll (<= 32)
        t = t_ref[:, j:j + 1].astype(jnp.float32)              # (tm, 1)
        freqs = t * w2pi                                       # (tm, half) VPU outer product
        base = j * dim_out
        # Direct slice stores -- no concat, no extra VMEM copy of the tile.
        o_ref[:, base:base + 1] = t.astype(o_ref.dtype)
        o_ref[:, base + 1:base + 1 + half] = jnp.sin(freqs).astype(o_ref.dtype)
        o_ref[:, base + 1 + half:base + dim_out] = jnp.cos(freqs).astype(o_ref.dtype)


def _pick_groups(n_rows, dim_out, *, target_lanes=256, max_groups=32):
    """Largest power-of-two g (dividing n_rows) s.t. g*dim_out reaches ~target lanes."""
    g = 1
    while (g * dim_out < target_lanes
           and g * 2 <= max_groups
           and n_rows % (g * 2) == 0):
        g *= 2
    return g


# --------------------------------------------------------------------------
# Wrapper, mirroring RandomFourierEmbed.forward.
# --------------------------------------------------------------------------
def random_fourier_embed(times, weights, *, target_block_bytes=6 * 1024 * 1024):
    """times: (B, N) or (B,); weights: (dim//2,). Returns (B, N, dim+1)."""
    if times.ndim == 1:
        times = times[:, None]
    B, N = times.shape
    half = int(weights.shape[0])
    dim_out = 2 * half + 1
    M = B * N

    out_dtype = times.dtype
    itemsize = jnp.dtype(out_dtype).itemsize

    # Fold g consecutive rows into the lane axis (free reshape of row-major bytes).
    g = _pick_groups(M, dim_out)
    rows = M // g
    row_width = g * dim_out

    # Row tile: sized from the lane-padded VMEM footprint of one row of the
    # input + output blocks; double-buffered total stays well under 24 MiB
    # (fits v7x's 64 MiB-per-TC VMEM with both cores pipelining).
    row_vmem = (_round_up(row_width, 128) + _round_up(g, 128)) * itemsize
    tm = target_block_bytes // row_vmem
    tm = max(8, min(int(tm), 16384))
    tm = (tm // 8) * 8
    tm = min(tm, _round_up(rows, 8))
    grid = (pl.cdiv(rows, tm),)          # ragged last block masked by Pallas

    t2d = times.reshape(rows, g)         # free: same row-major bytes
    w2d = weights.reshape(1, half)

    kernel = partial(_rfe_kernel, groups=g, half=half, dim_out=dim_out)

    cost = pl.CostEstimate(
        flops=M * half,
        transcendentals=2 * M * half,
        bytes_accessed=M * (dim_out + 1) * itemsize + half * weights.dtype.itemsize,
    )

    out = pl.pallas_call(
        kernel,
        out_shape=jax.ShapeDtypeStruct((rows, row_width), out_dtype),
        grid=grid,
        in_specs=[
            pl.BlockSpec((tm, g), lambda i: (i, 0)),        # row tile of packed times
            pl.BlockSpec((1, half), lambda i: (0, 0)),      # resident weights
        ],
        out_specs=pl.BlockSpec((tm, row_width), lambda i: (i, 0)),
        compiler_params=pltpu.CompilerParams(
            dimension_semantics=("parallel",),
            vmem_limit_bytes=32 * 1024 * 1024,
        ),
        cost_estimate=cost,
    )(t2d, w2d)

    # Free reshapes back to the module's output shape (no HBM copy).
    return out.reshape(B, N, dim_out)


# --------------------------------------------------------------------------
# Pure-JAX reference for correctness checking.
# --------------------------------------------------------------------------
def reference_forward(times, weights):
    if times.ndim == 1:
        times = times[:, None]
    freqs = times[..., None] * weights * _TWO_PI
    return jnp.concatenate(
        [times[..., None], jnp.sin(freqs), jnp.cos(freqs)], axis=-1
    )


if __name__ == "__main__":
    B, N, dim = 2, 8, 32
    half = dim // 2

    key = jax.random.PRNGKey(0)
    k_t, k_w, k_t1 = jax.random.split(key, 3)

    times = jax.random.normal(k_t, (B, N), dtype=jnp.float32)
    weights = jax.random.normal(k_w, (half,), dtype=jnp.float32)

    # (B, N) path
    out = random_fourier_embed(times, weights)
    out = jax.block_until_ready(out)
    ref = reference_forward(times, weights)
    assert out.shape == (B, N, dim + 1)
    assert jnp.allclose(out, ref, atol=1e-4, rtol=1e-4), "mismatch vs reference (2D)"

    # (B,) path (times.ndim == 1 -> 'b -> b 1')
    times_1d = jax.random.normal(k_t1, (B,), dtype=jnp.float32)
    out1 = jax.block_until_ready(random_fourier_embed(times_1d, weights))
    ref1 = reference_forward(times_1d, weights)
    assert out1.shape == (B, 1, dim + 1)
    assert jnp.allclose(out1, ref1, atol=1e-4, rtol=1e-4), "mismatch vs reference (1D)"

    print("KERNEL_OK")
</pallas_src>

<mosaic_0001>
module attributes {stable_mosaic.version = 11 : i64} {
  func.func @_rfe_kernel(%arg0: i32, %arg1: memref<8x8xf32, #tpu.memory_space<vmem>>, %arg2: memref<1x16xf32, #tpu.memory_space<vmem>>, %arg3: memref<8x264xf32, #tpu.memory_space<vmem>>) attributes {dimension_semantics = [#tpu.dimension_semantics<parallel>], iteration_bounds = array<i64: 1>, scalar_prefetch = 0 : i64, scratch_operands = 0 : i64, tpu.core_type = #tpu.core_type<tc>, window_params = [{transform_indices = @transform_0, window_bounds = array<i64: 8, 8>}, {pipeline_mode = #tpu.pipeline_mode<synchronous>, transform_indices = @transform_1, window_bounds = array<i64: 1, 16>}, {transform_indices = @transform_2, window_bounds = array<i64: 8, 264>}]} {
    %c0 = arith.constant 0 : index
    %c0_0 = arith.constant 0 : index
    %0 = vector.load %arg2[%c0, %c0_0] : memref<1x16xf32, #tpu.memory_space<vmem>>, vector<1x16xf32>
    %cst = arith.constant 6.28318548 : f32
    %1 = vector.broadcast %cst : f32 to vector<1x16xf32>
    %2 = arith.mulf %0, %1 : vector<1x16xf32>
    %c0_1 = arith.constant 0 : index
    %c0_2 = arith.constant 0 : index
    %3 = vector.load %arg1[%c0_1, %c0_2] : memref<8x8xf32, #tpu.memory_space<vmem>>, vector<8x1xf32>
    %4 = vector.broadcast %3 : vector<8x1xf32> to vector<8x16xf32>
    %5 = vector.broadcast %2 : vector<1x16xf32> to vector<8x16xf32>
    %6 = arith.mulf %4, %5 : vector<8x16xf32>
    %c0_3 = arith.constant 0 : index
    %c0_4 = arith.constant 0 : index
    %7 = vector.load %arg3[%c0_3, %c0_4] : memref<8x264xf32, #tpu.memory_space<vmem>>, vector<8x1xf32>
    tpu.vector_store %arg3[%c0_3, %c0_4], %3 {strides = array<i32>} : memref<8x264xf32, #tpu.memory_space<vmem>>, vector<8x1xf32>,
    %8 = math.sin %6 : vector<8x16xf32>
    %c0_5 = arith.constant 0 : index
    %c1 = arith.constant 1 : index
    %9 = vector.load %arg3[%c0_5, %c1] : memref<8x264xf32, #tpu.memory_space<vmem>>, vector<8x16xf32>
    tpu.vector_store %arg3[%c0_5, %c1], %8 {strides = array<i32>} : memref<8x264xf32, #tpu.memory_space<vmem>>, vector<8x16xf32>,
    %10 = math.cos %6 : vector<8x16xf32>
    %c0_6 = arith.constant 0 : index
    %c17 = arith.constant 17 : index
    %11 = vector.load %arg3[%c0_6, %c17] : memref<8x264xf32, #tpu.memory_space<vmem>>, vector<8x16xf32>
    tpu.vector_store %arg3[%c0_6, %c17], %10 {strides = array<i32>} : memref<8x264xf32, #tpu.memory_space<vmem>>, vector<8x16xf32>,
    %c0_7 = arith.constant 0 : index
    %c1_8 = arith.constant 1 : index
    %12 = vector.load %arg1[%c0_7, %c1_8] : memref<8x8xf32, #tpu.memory_space<vmem>>, vector<8x1xf32>
    %13 = vector.broadcast %12 : vector<8x1xf32> to vector<8x16xf32>
    %14 = vector.broadcast %2 : vector<1x16xf32> to vector<8x16xf32>
    %15 = arith.mulf %13, %14 : vector<8x16xf32>
    %c0_9 = arith.constant 0 : index
    %c33 = arith.constant 33 : index
    %16 = vector.load %arg3[%c0_9, %c33] : memref<8x264xf32, #tpu.memory_space<vmem>>, vector<8x1xf32>
    tpu.vector_store %arg3[%c0_9, %c33], %12 {strides = array<i32>} : memref<8x264xf32, #tpu.memory_space<vmem>>, vector<8x1xf32>,
    %17 = math.sin %15 : vector<8x16xf32>
    %c0_10 = arith.constant 0 : index
    %c34 = arith.constant 34 : index
    %18 = vector.load %arg3[%c0_10, %c34] : memref<8x264xf32, #tpu.memory_space<vmem>>, vector<8x16xf32>
    tpu.vector_store %arg3[%c0_10, %c34], %17 {strides = array<i32>} : memref<8x264xf32, #tpu.memory_space<vmem>>, vector<8x16xf32>,
    %19 = math.cos %15 : vector<8x16xf32>
    %c0_11 = arith.constant 0 : index
    %c50 = arith.constant 50 : index
    %20 = vector.load %arg3[%c0_11, %c50] : memref<8x264xf32, #tpu.memory_space<vmem>>, vector<8x16xf32>
    tpu.vector_store %arg3[%c0_11, %c50], %19 {strides = array<i32>} : memref<8x264xf32, #tpu.memory_space<vmem>>, vector<8x16xf32>,
    %c0_12 = arith.constant 0 : index
    %c2 = arith.constant 2 : index
    %21 = vector.load %arg1[%c0_12, %c2] : memref<8x8xf32, #tpu.memory_space<vmem>>, vector<8x1xf32>
    %22 = vector.broadcast %21 : vector<8x1xf32> to vector<8x16xf32>
    %23 = vector.broadcast %2 : vector<1x16xf32> to vector<8x16xf32>
    %24 = arith.mulf %22, %23 : vector<8x16xf32>
    %c0_13 = arith.constant 0 : index
    %c66 = arith.constant 66 : index
    %25 = vector.load %arg3[%c0_13, %c66] : memref<8x264xf32, #tpu.memory_space<vmem>>, vector<8x1xf32>
    tpu.vector_store %arg3[%c0_13, %c66], %21 {strides = array<i32>} : memref<8x264xf32, #tpu.memory_space<vmem>>, vector<8x1xf32>,
    %26 = math.sin %24 : vector<8x16xf32>
    %c0_14 = arith.constant 0 : index
    %c67 = arith.constant 67 : index
    %27 = vector.load %arg3[%c0_14, %c67] : memref<8x264xf32, #tpu.memory_space<vmem>>, vector<8x16xf32>
    tpu.vector_store %arg3[%c0_14, %c67], %26 {strides = array<i32>} : memref<8x264xf32, #tpu.memory_space<vmem>>, vector<8x16xf32>,
    %28 = math.cos %24 : vector<8x16xf32>
    %c0_15 = arith.constant 0 : index
    %c83 = arith.constant 83 : index
    %29 = vector.load %arg3[%c0_15, %c83] : memref<8x264xf32, #tpu.memory_space<vmem>>, vector<8x16xf32>
    tpu.vector_store %arg3[%c0_15, %c83], %28 {strides = array<i32>} : memref<8x264xf32, #tpu.memory_space<vmem>>, vector<8x16xf32>,
    %c0_16 = arith.constant 0 : index
    %c3 = arith.constant 3 : index
    %30 = vector.load %arg1[%c0_16, %c3] : memref<8x8xf32, #tpu.memory_space<vmem>>, vector<8x1xf32>
    %31 = vector.broadcast %30 : vector<8x1xf32> to vector<8x16xf32>
    %32 = vector.broadcast %2 : vector<1x16xf32> to vector<8x16xf32>
    %33 = arith.mulf %31, %32 : vector<8x16xf32>
    %c0_17 = arith.constant 0 : index
    %c99 = arith.constant 99 : index
    %34 = vector.load %arg3[%c0_17, %c99] : memref<8x264xf32, #tpu.memory_space<vmem>>, vector<8x1xf32>
    tpu.vector_store %arg3[%c0_17, %c99], %30 {strides = array<i32>} : memref<8x264xf32, #tpu.memory_space<vmem>>, vector<8x1xf32>,
    %35 = math.sin %33 : vector<8x16xf32>
    %c0_18 = arith.constant 0 : index
    %c100 = arith.constant 100 : index
    %36 = vector.load %arg3[%c0_18, %c100] : memref<8x264xf32, #tpu.memory_space<vmem>>, vector<8x16xf32>
    tpu.vector_store %arg3[%c0_18, %c100], %35 {strides = array<i32>} : memref<8x264xf32, #tpu.memory_space<vmem>>, vector<8x16xf32>,
    %37 = math.cos %33 : vector<8x16xf32>
    %c0_19 = arith.constant 0 : index
    %c116 = arith.constant 116 : index
    %38 = vector.load %arg3[%c0_19, %c116] : memref<8x264xf32, #tpu.memory_space<vmem>>, vector<8x16xf32>
    tpu.vector_store %arg3[%c0_19, %c116], %37 {strides = array<i32>} : memref<8x264xf32, #tpu.memory_space<vmem>>, vector<8x16xf32>,
    %c0_20 = arith.constant 0 : index
    %c4 = arith.constant 4 : index
    %39 = vector.load %arg1[%c0_20, %c4] : memref<8x8xf32, #tpu.memory_space<vmem>>, vector<8x1xf32>
    %40 = vector.broadcast %39 : vector<8x1xf32> to vector<8x16xf32>
    %41 = vector.broadcast %2 : vector<1x16xf32> to vector<8x16xf32>
    %42 = arith.mulf %40, %41 : vector<8x16xf32>
    %c0_21 = arith.constant 0 : index
    %c132 = arith.constant 132 : index
    %43 = vector.load %arg3[%c0_21, %c132] : memref<8x264xf32, #tpu.memory_space<vmem>>, vector<8x1xf32>
    tpu.vector_store %arg3[%c0_21, %c132], %39 {strides = array<i32>} : memref<8x264xf32, #tpu.memory_space<vmem>>, vector<8x1xf32>,
    %44 = math.sin %42 : vector<8x16xf32>
    %c0_22 = arith.constant 0 : index
    %c133 = arith.constant 133 : index
    %45 = vector.load %arg3[%c0_22, %c133] : memref<8x264xf32, #tpu.memory_space<vmem>>, vector<8x16xf32>
    tpu.vector_store %arg3[%c0_22, %c133], %44 {strides = array<i32>} : memref<8x264xf32, #tpu.memory_space<vmem>>, vector<8x16xf32>,
    %46 = math.cos %42 : vector<8x16xf32>
    %c0_23 = arith.constant 0 : index
    %c149 = arith.constant 149 : index
    %47 = vector.load %arg3[%c0_23, %c149] : memref<8x264xf32, #tpu.memory_space<vmem>>, vector<8x16xf32>
    tpu.vector_store %arg3[%c0_23, %c149], %46 {strides = array<i32>} : memref<8x264xf32, #tpu.memory_space<vmem>>, vector<8x16xf32>,
    %c0_24 = arith.constant 0 : index
    %c5 = arith.constant 5 : index
    %48 = vector.load %arg1[%c0_24, %c5] : memref<8x8xf32, #tpu.memory_space<vmem>>, vector<8x1xf32>
    %49 = vector.broadcast %48 : vector<8x1xf32> to vector<8x16xf32>
    %50 = vector.broadcast %2 : vector<1x16xf32> to vector<8x16xf32>
    %51 = arith.mulf %49, %50 : vector<8x16xf32>
    %c0_25 = arith.constant 0 : index
    %c165 = arith.constant 165 : index
    %52 = vector.load %arg3[%c0_25, %c165] : memref<8x264xf32, #tpu.memory_space<vmem>>, vector<8x1xf32>
    tpu.vector_store %arg3[%c0_25, %c165], %48 {strides = array<i32>} : memref<8x264xf32, #tpu.memory_space<vmem>>, vector<8x1xf32>,
    %53 = math.sin %51 : vector<8x16xf32>
    %c0_26 = arith.constant 0 : index
    %c166 = arith.constant 166 : index
    %54 = vector.load %arg3[%c0_26, %c166] : memref<8x264xf32, #tpu.memory_space<vmem>>, vector<8x16xf32>
    tpu.vector_store %arg3[%c0_26, %c166], %53 {strides = array<i32>} : memref<8x264xf32, #tpu.memory_space<vmem>>, vector<8x16xf32>,
    %55 = math.cos %51 : vector<8x16xf32>
    %c0_27 = arith.constant 0 : index
    %c182 = arith.constant 182 : index
    %56 = vector.load %arg3[%c0_27, %c182] : memref<8x264xf32, #tpu.memory_space<vmem>>, vector<8x16xf32>
    tpu.vector_store %arg3[%c0_27, %c182], %55 {strides = array<i32>} : memref<8x264xf32, #tpu.memory_space<vmem>>, vector<8x16xf32>,
    %c0_28 = arith.constant 0 : index
    %c6 = arith.constant 6 : index
    %57 = vector.load %arg1[%c0_28, %c6] : memref<8x8xf32, #tpu.memory_space<vmem>>, vector<8x1xf32>
    %58 = vector.broadcast %57 : vector<8x1xf32> to vector<8x16xf32>
    %59 = vector.broadcast %2 : vector<1x16xf32> to vector<8x16xf32>
    %60 = arith.mulf %58, %59 : vector<8x16xf32>
    %c0_29 = arith.constant 0 : index
    %c198 = arith.constant 198 : index
    %61 = vector.load %arg3[%c0_29, %c198] : memref<8x264xf32, #tpu.memory_space<vmem>>, vector<8x1xf32>
    tpu.vector_store %arg3[%c0_29, %c198], %57 {strides = array<i32>} : memref<8x264xf32, #tpu.memory_space<vmem>>, vector<8x1xf32>,
    %62 = math.sin %60 : vector<8x16xf32>
    %c0_30 = arith.constant 0 : index
    %c199 = arith.constant 199 : index
    %63 = vector.load %arg3[%c0_30, %c199] : memref<8x264xf32, #tpu.memory_space<vmem>>, vector<8x16xf32>
    tpu.vector_store %arg3[%c0_30, %c199], %62 {strides = array<i32>} : memref<8x264xf32, #tpu.memory_space<vmem>>, vector<8x16xf32>,
    %64 = math.cos %60 : vector<8x16xf32>
    %c0_31 = arith.constant 0 : index
    %c215 = arith.constant 215 : index
    %65 = vector.load %arg3[%c0_31, %c215] : memref<8x264xf32, #tpu.memory_space<vmem>>, vector<8x16xf32>
    tpu.vector_store %arg3[%c0_31, %c215], %64 {strides = array<i32>} : memref<8x264xf32, #tpu.memory_space<vmem>>, vector<8x16xf32>,
    %c0_32 = arith.constant 0 : index
    %c7 = arith.constant 7 : index
    %66 = vector.load %arg1[%c0_32, %c7] : memref<8x8xf32, #tpu.memory_space<vmem>>, vector<8x1xf32>
    %67 = vector.broadcast %66 : vector<8x1xf32> to vector<8x16xf32>
    %68 = vector.broadcast %2 : vector<1x16xf32> to vector<8x16xf32>
    %69 = arith.mulf %67, %68 : vector<8x16xf32>
    %c0_33 = arith.constant 0 : index
    %c231 = arith.constant 231 : index
    %70 = vector.load %arg3[%c0_33, %c231] : memref<8x264xf32, #tpu.memory_space<vmem>>, vector<8x1xf32>
    tpu.vector_store %arg3[%c0_33, %c231], %66 {strides = array<i32>} : memref<8x264xf32, #tpu.memory_space<vmem>>, vector<8x1xf32>,
    %71 = math.sin %69 : vector<8x16xf32>
    %c0_34 = arith.constant 0 : index
    %c232 = arith.constant 232 : index
    %72 = vector.load %arg3[%c0_34, %c232] : memref<8x264xf32, #tpu.memory_space<vmem>>, vector<8x16xf32>
    tpu.vector_store %arg3[%c0_34, %c232], %71 {strides = array<i32>} : memref<8x264xf32, #tpu.memory_space<vmem>>, vector<8x16xf32>,
    %73 = math.cos %69 : vector<8x16xf32>
    %c0_35 = arith.constant 0 : index
    %c248 = arith.constant 248 : index
    %74 = vector.load %arg3[%c0_35, %c248] : memref<8x264xf32, #tpu.memory_space<vmem>>, vector<8x16xf32>
    tpu.vector_store %arg3[%c0_35, %c248], %73 {strides = array<i32>} : memref<8x264xf32, #tpu.memory_space<vmem>>, vector<8x16xf32>,
    return
  }
  func.func @transform_0(%arg0: i32) -> (i32, i32) {
    %c0_i32 = arith.constant 0 : i32
    %c0_i32_0 = arith.constant 0 : i32
    return %arg0, %c0_i32 : i32, i32
  }
  func.func @transform_1(%arg0: i32) -> (i32, i32) {
    %c0_i32 = arith.constant 0 : i32
    %c0_i32_0 = arith.constant 0 : i32
    %c0_i32_1 = arith.constant 0 : i32
    return %c0_i32, %c0_i32_0 : i32, i32
  }
  func.func @transform_2(%arg0: i32) -> (i32, i32) {
    %c0_i32 = arith.constant 0 : i32
    %c0_i32_0 = arith.constant 0 : i32
    return %arg0, %c0_i32 : i32, i32
  }
}

</mosaic_0001>

<llo_original>
// kernel: tpu_custom_call.1
$region0: #{tpu_custom_call.1}
  #allocation0 [shape = 'u32[]', space=smem, size = 0x4, offset = 0x4, fixed_abs, tag = 'smem constant byte address 0x4 - core index']
  #allocation1 [shape = 'u32[144,128]{1,0:T(1,128)}', space=vmem, size = 0x12000, scoped, tag = 'internal scratch']
  %s0 = inlined_call_operand.hbm [shape: f32[2,8], index: 0, kind: input, shape index: {}]
  %s1 = inlined_call_operand.vmem [shape: f32[1,16], index: 1, kind: input, shape index: {}]
  %s2 = inlined_call_operand.hbm [shape: f32[2,264], index: 2, kind: output, shape index: {}]
  %s3 = sld [smem:[#allocation0]]
  $region22: #{tpu_custom_call.1} parent=0
    _
  %s5 = ssub.s32 1, %s3
  %s6 = scalar_select 0, %s5, %s3
  $region1: #{tpu_custom_call.1} parent=0
    #allocation2 [shape = 'u8[4096]{0}', space=vmem, size = 0x1000, scoped, tag = 'input window, operand 0, single buffered']
    #allocation3 [shape = 's32[1]{0}', space=sflag, size = 0x4, scoped, tag = 'scoped memory for tpu_custom_call.1']
    #allocation4 [shape = 's32[1]{0}', space=sflag, size = 0x4, scoped, tag = 'scoped memory for tpu_custom_call.1']
    #allocation5 [shape = 'u8[12288]{0}', space=vmem, size = 0x3000, scoped, tag = 'output window, operand 0, single buffered']
    %7 = vsyncpa [#allocation3], 0
    %8 = vsyncpa [#allocation4], 0
    // Predicated region
    $region2: #{tpu_custom_call.1} parent=1 // pred_check
      _
    $region3: #{tpu_custom_call.1} parent=1 // pred_check_branch
      %10 = sbr.rel (0) target = $region5
    $region4: #{tpu_custom_call.1} parent=1 // pred_region
      %s12 = ssub.s32 128, 32
      %13 = vsyncadd [#allocation3], %s12
      %s14 = sshll.u32 [#allocation2], 4
      %s15 = int_to_ptr.vmem [resolvable:$true] %s14
      %20 = dma.hbm_to_vmem [thread:$0]  %s0, 32, %s15, [#allocation3], 32, 32, 2
    $region5: #{tpu_custom_call.1} parent=1 // pred_fallthru
      _
    // Predicated region
    $region6: #{tpu_custom_call.1} parent=1 // pred_check
      _
    $region7: #{tpu_custom_call.1} parent=1 // pred_check_branch
      %22 = sbr.rel (0) target = $region9
    $region8: #{tpu_custom_call.1} parent=1 // pred_region
      _
    $region9: #{tpu_custom_call.1} parent=1 // pred_fallthru
      _
    // Predicated region
    $region10: #{tpu_custom_call.1} parent=1 // pred_check
      _
    $region11: #{tpu_custom_call.1} parent=1 // pred_check_branch
      %24 = sbr.rel (0) target = $region13
    $region12: #{tpu_custom_call.1} parent=1 // pred_region
      %25 = dma.done [#allocation3], 128
    $region13: #{tpu_custom_call.1} parent=1 // pred_fallthru
      _
    %v26 = vld [vmem:[%s1] sm:$0x1]
    %v27 = vmul.f32 %v26, 6.2831855
    %v28 = vld [vmem:[#allocation2] sm:$0xff]
    %30 = vset.pattern.permute.xlu0 0
    %31 = vperm.xlu0 %30, %v28
    %v32 = vpop.permute.xlu0 %31
    %v35 = vlaneseq
    %v36 = vshrl.u32 %v35, 7
    %v37 = vsub.s32 0, %v36
    %v38 = vrot.slane %v27, %v37
    %v40 = vmul.f32 %v32, %v38
    %v41 = vcombine.high %v28, %v28
    %v43 = vunpack.c.l.s4 1983009808
    %v44 = vunpack.c.0.s8 %v43
    %v45 = vlaneseq
    %v46 = vshrl.u32 %v45, 7
    %v47 = vsub.s32 %v44, %v46
    %v48 = vrot.slane %v28, %v47
    %v50 = vunpack.c.l.s4 1983009808
    %v51 = vunpack.c.0.s8 %v50
    %v52 = vlaneseq
    %v53 = vshrl.u32 %v52, 7
    %v54 = vsub.s32 %v51, %v53
    %v55 = vrot.slane %v41, %v54
    %v56 = vcombine.high %v48, %v48
    %v57 = vcombine.high %v55, %v55
    %vm62 = vcmask 1024
    %63 = vst.msk [vmem:[#allocation5] sm:$0x3] %vm62, %v48
    %64 = vst.msk [vmem:[#allocation5 + $0x6] sm:$0x3] %vm62, %v56
    %65 = vst.msk [vmem:[#allocation5 + $0xc] sm:$0x3] %vm62, %v55
    %66 = vst.msk [vmem:[#allocation5 + $0x12] sm:$0x3] %vm62, %v57
    %v67 = vand.u32 2147483647, %v40
    %vm68 = vcmp.le.f32.partialorder %v67, 0.7853982
    %vm69 = vcmp.lt.s32.totalorder %v40, 0
    %v70 = vand.u32 %v40, 2139095040
    %v71 = vshrl.u32 %v70, 23
    %v72 = vsub.s32 %v71, 127
    %v73 = vand.u32 2147483647, %v40
    %v74 = vand.u32 %v73, 8388607
    %v75 = vor.u32 %v74, 8388608
    %v76 = vsub.s32 0, %v75
    %v77 = vadd.s32 %v72, 1
    %vm78 = vcmp.gt.s32.totalorder %v77, 0
    %v79 = vsel %vm78, %v77, 0
    %v80 = vshrl.u32 %v79, 5
    %v81 = vand.u32 %v79, 31
    %v82 = vsub.s32 32, %v81
    %v83 = vshrl.u32 683565275, %v82
    %v84 = vshll.u32 683565275, %v81
    %v85 = vshrl.u32 2475754826, %v82
    %v86 = vor.u32 %v84, %v85
    %v87 = vshll.u32 2475754826, %v81
    %v88 = vshrl.u32 2131351028, %v82
    %v89 = vor.u32 %v87, %v88
    %v90 = vshll.u32 2131351028, %v81
    %v91 = vshrl.u32 2102212464, %v82
    %v92 = vor.u32 %v90, %v91
    %v93 = vshll.u32 2102212464, %v81
    %v94 = vshrl.u32 920167782, %v82
    %v95 = vor.u32 %v93, %v94
    %v96 = vshll.u32 920167782, %v81
    %v97 = vshrl.u32 1326507024, %v82
    %v98 = vor.u32 %v96, %v97
    %vm99 = vcmp.lt.s32.totalorder %v80, 1
    %vm100 = vcmp.lt.s32.totalorder %v80, 2
    %vm101 = vcmp.lt.s32.totalorder %v80, 3
    %vm102 = vcmp.lt.s32.totalorder %v80, 4
    %v103 = vsel %vm99, %v83, %v86
    %v104 = vsel %vm102, %v92, 2102212464
    %v105 = vsel %vm101, %v89, %v104
    %v106 = vsel %vm100, %v103, %v105
    %v107 = vsel %vm99, %v86, %v89
    %v108 = vsel %vm102, %v95, 920167782
    %v109 = vsel %vm101, %v92, %v108
    %v110 = vsel %vm100, %v107, %v109
    %v111 = vsel %vm99, %v89, %v92
    %v112 = vsel %vm102, %v98, 1326507024
    %v113 = vsel %vm101, %v95, %v112
    %v114 = vsel %vm100, %v111, %v113
    %v115 = vshll.u32 %v75, 8
    %v116 = vmul.u32.u64.compose %v115, %v114
    %v117 = vextract.low.u32 %v116
    %v118 = vextract.high.u32 %v116
    %v119 = vmul.u32.u64.compose %v115, %v110
    %v120 = vextract.low.u32 %v119
    %v121 = vextract.high.u32 %v119
    %v122 = vmul.u32 %v115, %v106
    %v123 = vadd.s32 %v118, %v120
    %vm124 = vc.u32 %v118, %v120
    %v125 = vadd.s32 %v121, 1
    %v126 = vsel %vm124, %v125, %v121
    %v127 = vadd.s32 %v122, %v126
    %v128 = vadd.s32 %v127, 536870912
    %v129 = vshrl.u32 %v128, 30
    %v130 = vshll.u32 %v129, 30
    %v131 = vsub.s32 %v127, %v130
    %vm132 = vcmp.lt.s32.totalorder %v131, 0
    %v133 = vsub.s32 0, %v131
    %v134 = vsel %vm132, %v133, %v131
    %v135 = vclz %v134
    %v136 = vsub.s32 %v135, 2
    %vm137 = vcmp.gt.s32.totalorder 0, %v136
    %v138 = vsel %vm137, 0, %v136
    %v139 = vsub.s32 32, %v138
    %v140 = vshll.u32 %v131, %v138
    %v141 = vshrl.u32 %v123, %v139
    %v142 = vor.u32 %v140, %v141
    %v143 = vsub.s32 4294967266, %v138
    %v144 = vadd.s32 %v143, 127
    %v145 = vshll.u32 %v144, 23
    %v146 = vor.u32 4788187, %v145
    %v147 = vand.u32 2147483647, %v146
    %v149 = vcvt.s32.f32 %v142
    %v150 = vmul.f32 %v149, %v147
    %v151 = vxor.u32 %v150, 2147483648
    %v152 = vsel %vm69, %v151, %v150
    %v153 = vsub.s32 4, %v129
    %v154 = vsel %vm69, %v153, %v129
    %v155 = vsel %vm68, %v40, %v152
    %v156 = vsel %vm68, 0, %v154
    %v157 = vcosq.f32.pop %v155
    %v158 = vsinq.f32.pop %v155
    %vm159 = vweird.f32 %v40
    %v160 = vadd.s32 %v156, 3
    %v161 = vand.u32 %v160, 3
    %vm162 = vcmp.lt.s32.totalorder %v161, 2
    %vm163 = vcmp.eq.s32.totalorder %v161, 0
    %v164 = vxor.u32 %v158, 2147483648
    %v165 = vsel %vm163, %v157, %v164
    %vm166 = vcmp.eq.s32.totalorder %v161, 2
    %v167 = vxor.u32 %v157, 2147483648
    %v168 = vsel %vm166, %v167, %v158
    %v169 = vsel %vm162, %v165, %v168
    %v170 = vsel %vm159, nan, %v169
    %v172 = vcombine.high %v170, %v170
    %v174 = vunpack.c.l.s4 1983009808
    %v175 = vunpack.c.0.s8 %v174
    %v176 = vlaneseq
    %v177 = vshrl.u32 %v176, 7
    %v178 = vsub.s32 %v175, %v177
    %v179 = vrot.slane %v170, %v178
    %v181 = vunpack.c.l.s4 1983009808
    %v182 = vunpack.c.0.s8 %v181
    %v183 = vlaneseq
    %v184 = vshrl.u32 %v183, 7
    %v185 = vsub.s32 %v182, %v184
    %v186 = vrot.slane %v172, %v185
    %v187 = vcombine.high %v179, %v179
    %v188 = vcombine.high %v186, %v186
    %189 = vrot.lane.b32.xlu0 %v179, 1
    %v190 = vpop.permute.xlu0 %189
    %191 = vrot.lane.b32.xlu0 %v187, 1
    %v192 = vpop.permute.xlu0 %191
    %193 = vrot.lane.b32.xlu0 %v186, 1
    %v194 = vpop.permute.xlu0 %193
    %195 = vrot.lane.b32.xlu0 %v188, 1
    %v196 = vpop.permute.xlu0 %195
    %vm201 = vcmask 132104
    %202 = vst.msk [vmem:[#allocation5] sm:$0x3] %vm201, %v190
    %203 = vst.msk [vmem:[#allocation5 + $0x6] sm:$0x3] %vm201, %v192
    %204 = vst.msk [vmem:[#allocation5 + $0xc] sm:$0x3] %vm201, %v194
    %205 = vst.msk [vmem:[#allocation5 + $0x12] sm:$0x3] %vm201, %v196
    %v206 = vand.u32 2147483647, %v40
    %vm207 = vcmp.le.f32.partialorder %v206, 0.7853982
    %vm208 = vcmp.lt.s32.totalorder %v40, 0
    %v209 = vand.u32 %v40, 2139095040
    %v210 = vshrl.u32 %v209, 23
    %v211 = vsub.s32 %v210, 127
    %v212 = vand.u32 2147483647, %v40
    %v213 = vand.u32 %v212, 8388607
    %v214 = vor.u32 %v213, 8388608
    %v215 = vsub.s32 0, %v214
    %v216 = vadd.s32 %v211, 1
    %vm217 = vcmp.gt.s32.totalorder %v216, 0
    %v218 = vsel %vm217, %v216, 0
    %v219 = vshrl.u32 %v218, 5
    %v220 = vand.u32 %v218, 31
    %v221 = vsub.s32 32, %v220
    %v222 = vshrl.u32 683565275, %v221
    %v223 = vshll.u32 683565275, %v220
    %v224 = vshrl.u32 2475754826, %v221
    %v225 = vor.u32 %v223, %v224
    %v226 = vshll.u32 2475754826, %v220
    %v227 = vshrl.u32 2131351028, %v221
    %v228 = vor.u32 %v226, %v227
    %v229 = vshll.u32 2131351028, %v220
    %v230 = vshrl.u32 2102212464, %v221
    %v231 = vor.u32 %v229, %v230
    %v232 = vshll.u32 2102212464, %v220
    %v233 = vshrl.u32 920167782, %v221
    %v234 = vor.u32 %v232, %v233
    %v235 = vshll.u32 920167782, %v220
    %v236 = vshrl.u32 1326507024, %v221
    %v237 = vor.u32 %v235, %v236
    %vm238 = vcmp.lt.s32.totalorder %v219, 1
    %vm239 = vcmp.lt.s32.totalorder %v219, 2
    %vm240 = vcmp.lt.s32.totalorder %v219, 3
    %vm241 = vcmp.lt.s32.totalorder %v219, 4
    %v242 = vsel %vm238, %v222, %v225
    %v243 = vsel %vm241, %v231, 2102212464
    %v244 = vsel %vm240, %v228, %v243
    %v245 = vsel %vm239, %v242, %v244
    %v246 = vsel %vm238, %v225, %v228
    %v247 = vsel %vm241, %v234, 920167782
    %v248 = vsel %vm240, %v231, %v247
    %v249 = vsel %vm239, %v246, %v248
    %v250 = vsel %vm238, %v228, %v231
    %v251 = vsel %vm241, %v237, 1326507024
    %v252 = vsel %vm240, %v234, %v251
    %v253 = vsel %vm239, %v250, %v252
    %v254 = vshll.u32 %v214, 8
    %v255 = vmul.u32.u64.compose %v254, %v253
    %v256 = vextract.low.u32 %v255
    %v257 = vextract.high.u32 %v255
    %v258 = vmul.u32.u64.compose %v254, %v249
    %v259 = vextract.low.u32 %v258
    %v260 = vextract.high.u32 %v258
    %v261 = vmul.u32 %v254, %v245
    %v262 = vadd.s32 %v257, %v259
    %vm263 = vc.u32 %v257, %v259
    %v264 = vadd.s32 %v260, 1
    %v265 = vsel %vm263, %v264, %v260
    %v266 = vadd.s32 %v261, %v265
    %v267 = vadd.s32 %v266, 536870912
    %v268 = vshrl.u32 %v267, 30
    %v269 = vshll.u32 %v268, 30
    %v270 = vsub.s32 %v266, %v269
    %vm271 = vcmp.lt.s32.totalorder %v270, 0
    %v272 = vsub.s32 0, %v270
    %v273 = vsel %vm271, %v272, %v270
    %v274 = vclz %v273
    %v275 = vsub.s32 %v274, 2
    %vm276 = vcmp.gt.s32.totalorder 0, %v275
    %v277 = vsel %vm276, 0, %v275
    %v278 = vsub.s32 32, %v277
    %v279 = vshll.u32 %v270, %v277
    %v280 = vshrl.u32 %v262, %v278
    %v281 = vor.u32 %v279, %v280
    %v282 = vsub.s32 4294967266, %v277
    %v283 = vadd.s32 %v282, 127
    %v284 = vshll.u32 %v283, 23
    %v285 = vor.u32 4788187, %v284
    %v286 = vand.u32 2147483647, %v285
    %v288 = vcvt.s32.f32 %v281
    %v289 = vmul.f32 %v288, %v286
    %v290 = vxor.u32 %v289, 2147483648
    %v291 = vsel %vm208, %v290, %v289
    %v292 = vsub.s32 4, %v268
    %v293 = vsel %vm208, %v292, %v268
    %v294 = vsel %vm207, %v40, %v291
    %v295 = vsel %vm207, 0, %v293
    %v296 = vcosq.f32.pop %v294
    %v297 = vsinq.f32.pop %v294
    %vm298 = vweird.f32 %v40
    %v299 = vand.u32 %v295, 3
    %vm300 = vcmp.lt.s32.totalorder %v299, 2
    %vm301 = vcmp.eq.s32.totalorder %v299, 0
    %v302 = vxor.u32 %v297, 2147483648
    %v303 = vsel %vm301, %v296, %v302
    %vm304 = vcmp.eq.s32.totalorder %v299, 2
    %v305 = vxor.u32 %v296, 2147483648
    %v306 = vsel %vm304, %v305, %v297
    %v307 = vsel %vm300, %v303, %v306
    %v308 = vsel %vm298, nan, %v307
    %v310 = vcombine.high %v308, %v308
    %v312 = vunpack.c.l.s4 1983009808
    %v313 = vunpack.c.0.s8 %v312
    %v314 = vlaneseq
    %v315 = vshrl.u32 %v314, 7
    %v316 = vsub.s32 %v313, %v315
    %v317 = vrot.slane %v308, %v316
    %v319 = vunpack.c.l.s4 1983009808
    %v320 = vunpack.c.0.s8 %v319
    %v321 = vlaneseq
    %v322 = vshrl.u32 %v321, 7
    %v323 = vsub.s32 %v320, %v322
    %v324 = vrot.slane %v310, %v323
    %v325 = vcombine.high %v317, %v317
    %v326 = vcombine.high %v324, %v324
    %327 = vrot.lane.b32.xlu0 %v317, 17
    %v328 = vpop.permute.xlu0 %327
    %329 = vrot.lane.b32.xlu0 %v325, 17
    %v330 = vpop.permute.xlu0 %329
    %331 = vrot.lane.b32.xlu0 %v324, 17
    %v332 = vpop.permute.xlu0 %331
    %333 = vrot.lane.b32.xlu0 %v326, 17
    %v334 = vpop.permute.xlu0 %333
    %vm339 = vcmask 263304
    %340 = vst.msk [vmem:[#allocation5] sm:$0x3] %vm339, %v328
    %341 = vst.msk [vmem:[#allocation5 + $0x6] sm:$0x3] %vm339, %v330
    %342 = vst.msk [vmem:[#allocation5 + $0xc] sm:$0x3] %vm339, %v332
    %343 = vst.msk [vmem:[#allocation5 + $0x12] sm:$0x3] %vm339, %v334
    %v344 = vld [vmem:[#allocation2] sm:$0xff]
    %346 = vset.pattern.permute.xlu0 1
    %347 = vperm.xlu0 %346, %v344
    %v348 = vpop.permute.xlu0 %347
    %v350 = vmul.f32 %v348, %v38
    %v351 = vcombine.high %v344, %v344
    %v353 = vunpack.c.l.s4 1983009808
    %v354 = vunpack.c.0.s8 %v353
    %v355 = vlaneseq
    %v356 = vshrl.u32 %v355, 7
    %v357 = vsub.s32 %v354, %v356
    %v358 = vrot.slane %v344, %v357
    %v360 = vunpack.c.l.s4 1983009808
    %v361 = vunpack.c.0.s8 %v360
    %v362 = vlaneseq
    %v363 = vshrl.u32 %v362, 7
    %v364 = vsub.s32 %v361, %v363
    %v365 = vrot.slane %v351, %v364
    %v366 = vcombine.high %v358, %v358
    %v367 = vcombine.high %v365, %v365
    %368 = vrot.lane.b32.xlu0 %v358, 32
    %v369 = vpop.permute.xlu0 %368
    %370 = vrot.lane.b32.xlu0 %v366, 32
    %v371 = vpop.permute.xlu0 %370
    %372 = vrot.lane.b32.xlu0 %v365, 32
    %v373 = vpop.permute.xlu0 %372
    %374 = vrot.lane.b32.xlu0 %v367, 32
    %v375 = vpop.permute.xlu0 %374
    %vm380 = vcmask 271624
    %381 = vst.msk [vmem:[#allocation5] sm:$0x3] %vm380, %v369
    %382 = vst.msk [vmem:[#allocation5 + $0x6] sm:$0x3] %vm380, %v371
    %383 = vst.msk [vmem:[#allocation5 + $0xc] sm:$0x3] %vm380, %v373
    %384 = vst.msk [vmem:[#allocation5 + $0x12] sm:$0x3] %vm380, %v375
    %v385 = vand.u32 2147483647, %v350
    %vm386 = vcmp.le.f32.partialorder %v385, 0.7853982
    %vm387 = vcmp.lt.s32.totalorder %v350, 0
    %v388 = vand.u32 %v350, 2139095040
    %v389 = vshrl.u32 %v388, 23
    %v390 = vsub.s32 %v389, 127
    %v391 = vand.u32 2147483647, %v350
    %v392 = vand.u32 %v391, 8388607
    %v393 = vor.u32 %v392, 8388608
    %v394 = vsub.s32 0, %v393
    %v395 = vadd.s32 %v390, 1
    %vm396 = vcmp.gt.s32.totalorder %v395, 0
    %v397 = vsel %vm396, %v395, 0
    %v398 = vshrl.u32 %v397, 5
    %v399 = vand.u32 %v397, 31
    %v400 = vsub.s32 32, %v399
    %v401 = vshrl.u32 683565275, %v400
    %v402 = vshll.u32 683565275, %v399
    %v403 = vshrl.u32 2475754826, %v400
    %v404 = vor.u32 %v402, %v403
    %v405 = vshll.u32 2475754826, %v399
    %v406 = vshrl.u32 2131351028, %v400
    %v407 = vor.u32 %v405, %v406
    %v408 = vshll.u32 2131351028, %v399
    %v409 = vshrl.u32 2102212464, %v400
    %v410 = vor.u32 %v408, %v409
    %v411 = vshll.u32 2102212464, %v399
    %v412 = vshrl.u32 920167782, %v400
    %v413 = vor.u32 %v411, %v412
    %v414 = vshll.u32 920167782, %v399
    %v415 = vshrl.u32 1326507024, %v400
    %v416 = vor.u32 %v414, %v415
    %vm417 = vcmp.lt.s32.totalorder %v398, 1
    %vm418 = vcmp.lt.s32.totalorder %v398, 2
    %vm419 = vcmp.lt.s32.totalorder %v398, 3
    %vm420 = vcmp.lt.s32.totalorder %v398, 4
    %v421 = vsel %vm417, %v401, %v404
    %v422 = vsel %vm420, %v410, 2102212464
    %v423 = vsel %vm419, %v407, %v422
    %v424 = vsel %vm418, %v421, %v423
    %v425 = vsel %vm417, %v404, %v407
    %v426 = vsel %vm420, %v413, 920167782
    %v427 = vsel %vm419, %v410, %v426
    %v428 = vsel %vm418, %v425, %v427
    %v429 = vsel %vm417, %v407, %v410
    %v430 = vsel %vm420, %v416, 1326507024
    %v431 = vsel %vm419, %v413, %v430
    %v432 = vsel %vm418, %v429, %v431
    %v433 = vshll.u32 %v393, 8
    %v434 = vmul.u32.u64.compose %v433, %v432
    %v435 = vextract.low.u32 %v434
    %v436 = vextract.high.u32 %v434
    %v437 = vmul.u32.u64.compose %v433, %v428
    %v438 = vextract.low.u32 %v437
    %v439 = vextract.high.u32 %v437
    %v440 = vmul.u32 %v433, %v424
    %v441 = vadd.s32 %v436, %v438
    %vm442 = vc.u32 %v436, %v438
    %v443 = vadd.s32 %v439, 1
    %v444 = vsel %vm442, %v443, %v439
    %v445 = vadd.s32 %v440, %v444
    %v446 = vadd.s32 %v445, 536870912
    %v447 = vshrl.u32 %v446, 30
    %v448 = vshll.u32 %v447, 30
    %v449 = vsub.s32 %v445, %v448
    %vm450 = vcmp.lt.s32.totalorder %v449, 0
    %v451 = vsub.s32 0, %v449
    %v452 = vsel %vm450, %v451, %v449
    %v453 = vclz %v452
    %v454 = vsub.s32 %v453, 2
    %vm455 = vcmp.gt.s32.totalorder 0, %v454
    %v456 = vsel %vm455, 0, %v454
    %v457 = vsub.s32 32, %v456
    %v458 = vshll.u32 %v449, %v456
    %v459 = vshrl.u32 %v441, %v457
    %v460 = vor.u32 %v458, %v459
    %v461 = vsub.s32 4294967266, %v456
    %v462 = vadd.s32 %v461, 127
    %v463 = vshll.u32 %v462, 23
    %v464 = vor.u32 4788187, %v463
    %v465 = vand.u32 2147483647, %v464
    %v467 = vcvt.s32.f32 %v460
    %v468 = vmul.f32 %v467, %v465
    %v469 = vxor.u32 %v468, 2147483648
    %v470 = vsel %vm387, %v469, %v468
    %v471 = vsub.s32 4, %v447
    %v472 = vsel %vm387, %v471, %v447
    %v473 = vsel %vm386, %v350, %v470
    %v474 = vsel %vm386, 0, %v472
    %v475 = vcosq.f32.pop %v473
    %v476 = vsinq.f32.pop %v473
    %vm477 = vweird.f32 %v350
    %v478 = vadd.s32 %v474, 3
    %v479 = vand.u32 %v478, 3
    %vm480 = vcmp.lt.s32.totalorder %v479, 2
    %vm481 = vcmp.eq.s32.totalorder %v479, 0
    %v482 = vxor.u32 %v476, 2147483648
    %v483 = vsel %vm481, %v475, %v482
    %vm484 = vcmp.eq.s32.totalorder %v479, 2
    %v485 = vxor.u32 %v475, 2147483648
    %v486 = vsel %vm484, %v485, %v476
    %v487 = vsel %vm480, %v483, %v486
    %v488 = vsel %vm477, nan, %v487
    %v490 = vcombine.high %v488, %v488
    %v492 = vunpack.c.l.s4 1983009808
    %v493 = vunpack.c.0.s8 %v492
    %v494 = vlaneseq
    %v495 = vshrl.u32 %v494, 7
    %v496 = vsub.s32 %v493, %v495
    %v497 = vrot.slane %v488, %v496
    %v499 = vunpack.c.l.s4 1983009808
    %v500 = vunpack.c.0.s8 %v499
    %v501 = vlaneseq
    %v502 = vshrl.u32 %v501, 7
    %v503 = vsub.s32 %v500, %v502
    %v504 = vrot.slane %v490, %v503
    %v505 = vcombine.high %v497, %v497
    %v506 = vcombine.high %v504, %v504
    %507 = vrot.lane.b32.xlu0 %v497, 34
    %v508 = vpop.permute.xlu0 %507
    %509 = vrot.lane.b32.xlu0 %v505, 34
    %v510 = vpop.permute.xlu0 %509
    %511 = vrot.lane.b32.xlu0 %v504, 34
    %v512 = vpop.permute.xlu0 %511
    %513 = vrot.lane.b32.xlu0 %v506, 34
    %v514 = vpop.permute.xlu0 %513
    %vm519 = vcmask 402704
    %520 = vst.msk [vmem:[#allocation5] sm:$0x3] %vm519, %v508
    %521 = vst.msk [vmem:[#allocation5 + $0x6] sm:$0x3] %vm519, %v510
    %522 = vst.msk [vmem:[#allocation5 + $0xc] sm:$0x3] %vm519, %v512
    %523 = vst.msk [vmem:[#allocation5 + $0x12] sm:$0x3] %vm519, %v514
    %v524 = vand.u32 2147483647, %v350
    %vm525 = vcmp.le.f32.partialorder %v524, 0.7853982
    %vm526 = vcmp.lt.s32.totalorder %v350, 0
    %v527 = vand.u32 %v350, 2139095040
    %v528 = vshrl.u32 %v527, 23
    %v529 = vsub.s32 %v528, 127
    %v530 = vand.u32 2147483647, %v350
    %v531 = vand.u32 %v530, 8388607
    %v532 = vor.u32 %v531, 8388608
    %v533 = vsub.s32 0, %v532
    %v534 = vadd.s32 %v529, 1
    %vm535 = vcmp.gt.s32.totalorder %v534, 0
    %v536 = vsel %vm535, %v534, 0
    %v537 = vshrl.u32 %v536, 5
    %v538 = vand.u32 %v536, 31
    %v539 = vsub.s32 32, %v538
    %v540 = vshrl.u32 683565275, %v539
    %v541 = vshll.u32 683565275, %v538
    %v542 = vshrl.u32 2475754826, %v539
    %v543 = vor.u32 %v541, %v542
    %v544 = vshll.u32 2475754826, %v538
    %v545 = vshrl.u32 2131351028, %v539
    %v546 = vor.u32 %v544, %v545
    %v547 = vshll.u32 2131351028, %v538
    %v548 = vshrl.u32 2102212464, %v539
    %v549 = vor.u32 %v547, %v548
    %v550 = vshll.u32 2102212464, %v538
    %v551 = vshrl.u32 920167782, %v539
    %v552 = vor.u32 %v550, %v551
    %v553 = vshll.u32 920167782, %v538
    %v554 = vshrl.u32 1326507024, %v539
    %v555 = vor.u32 %v553, %v554
    %vm556 = vcmp.lt.s32.totalorder %v537, 1
    %vm557 = vcmp.lt.s32.totalorder %v537, 2
    %vm558 = vcmp.lt.s32.totalorder %v537, 3
    %vm559 = vcmp.lt.s32.totalorder %v537, 4
    %v560 = vsel %vm556, %v540, %v543
    %v561 = vsel %vm559, %v549, 2102212464
    %v562 = vsel %vm558, %v546, %v561
    %v563 = vsel %vm557, %v560, %v562
    %v564 = vsel %vm556, %v543, %v546
    %v565 = vsel %vm559, %v552, 920167782
    %v566 = vsel %vm558, %v549, %v565
    %v567 = vsel %vm557, %v564, %v566
    %v568 = vsel %vm556, %v546, %v549
    %v569 = vsel %vm559, %v555, 1326507024
    %v570 = vsel %vm558, %v552, %v569
    %v571 = vsel %vm557, %v568, %v570
    %v572 = vshll.u32 %v532, 8
    %v573 = vmul.u32.u64.compose %v572, %v571
    %v574 = vextract.low.u32 %v573
    %v575 = vextract.high.u32 %v573
    %v576 = vmul.u32.u64.compose %v572, %v567
    %v577 = vextract.low.u32 %v576
    %v578 = vextract.high.u32 %v576
    %v579 = vmul.u32 %v572, %v563
    %v580 = vadd.s32 %v575, %v577
    %vm581 = vc.u32 %v575, %v577
    %v582 = vadd.s32 %v578, 1
    %v583 = vsel %vm581, %v582, %v578
    %v584 = vadd.s32 %v579, %v583
    %v585 = vadd.s32 %v584, 536870912
    %v586 = vshrl.u32 %v585, 30
    %v587 = vshll.u32 %v586, 30
    %v588 = vsub.s32 %v584, %v587
    %vm589 = vcmp.lt.s32.totalorder %v588, 0
    %v590 = vsub.s32 0, %v588
    %v591 = vsel %vm589, %v590, %v588
    %v592 = vclz %v591
    %v593 = vsub.s32 %v592, 2
    %vm594 = vcmp.gt.s32.totalorder 0, %v593
    %v595 = vsel %vm594, 0, %v593
    %v596 = vsub.s32 32, %v595
    %v597 = vshll.u32 %v588, %v595
    %v598 = vshrl.u32 %v580, %v596
    %v599 = vor.u32 %v597, %v598
    %v600 = vsub.s32 4294967266, %v595
    %v601 = vadd.s32 %v600, 127
    %v602 = vshll.u32 %v601, 23
    %v603 = vor.u32 4788187, %v602
    %v604 = vand.u32 2147483647, %v603
    %v606 = vcvt.s32.f32 %v599
    %v607 = vmul.f32 %v606, %v604
    %v608 = vxor.u32 %v607, 2147483648
    %v609 = vsel %vm526, %v608, %v607
    %v610 = vsub.s32 4, %v586
    %v611 = vsel %vm526, %v610, %v586
    %v612 = vsel %vm525, %v350, %v609
    %v613 = vsel %vm525, 0, %v611
    %v614 = vcosq.f32.pop %v612
    %v615 = vsinq.f32.pop %v612
    %vm616 = vweird.f32 %v350
    %v617 = vand.u32 %v613, 3
    %vm618 = vcmp.lt.s32.totalorder %v617, 2
    %vm619 = vcmp.eq.s32.totalorder %v617, 0
    %v620 = vxor.u32 %v615, 2147483648
    %v621 = vsel %vm619, %v614, %v620
    %vm622 = vcmp.eq.s32.totalorder %v617, 2
    %v623 = vxor.u32 %v614, 2147483648
    %v624 = vsel %vm622, %v623, %v615
    %v625 = vsel %vm618, %v621, %v624
    %v626 = vsel %vm616, nan, %v625
    %v628 = vcombine.high %v626, %v626
    %v630 = vunpack.c.l.s4 1983009808
    %v631 = vunpack.c.0.s8 %v630
    %v632 = vlaneseq
    %v633 = vshrl.u32 %v632, 7
    %v634 = vsub.s32 %v631, %v633
    %v635 = vrot.slane %v626, %v634
    %v637 = vunpack.c.l.s4 1983009808
    %v638 = vunpack.c.0.s8 %v637
    %v639 = vlaneseq
    %v640 = vshrl.u32 %v639, 7
    %v641 = vsub.s32 %v638, %v640
    %v642 = vrot.slane %v628, %v641
    %v643 = vcombine.high %v635, %v635
    %v644 = vcombine.high %v642, %v642
    %645 = vrot.lane.b32.xlu0 %v635, 50
    %v646 = vpop.permute.xlu0 %645
    %647 = vrot.lane.b32.xlu0 %v643, 50
    %v648 = vpop.permute.xlu0 %647
    %649 = vrot.lane.b32.xlu0 %v642, 50
    %v650 = vpop.permute.xlu0 %649
    %651 = vrot.lane.b32.xlu0 %v644, 50
    %v652 = vpop.permute.xlu0 %651
    %vm657 = vcmask 533904
    %658 = vst.msk [vmem:[#allocation5] sm:$0x3] %vm657, %v646
    %659 = vst.msk [vmem:[#allocation5 + $0x6] sm:$0x3] %vm657, %v648
    %660 = vst.msk [vmem:[#allocation5 + $0xc] sm:$0x3] %vm657, %v650
    %661 = vst.msk [vmem:[#allocation5 + $0x12] sm:$0x3] %vm657, %v652
    %v662 = vld [vmem:[#allocation2] sm:$0xff]
    %664 = vset.pattern.permute.xlu0 2
    %665 = vperm.xlu0 %664, %v662
    %v666 = vpop.permute.xlu0 %665
    %v668 = vmul.f32 %v666, %v38
    %v669 = vcombine.high %v662, %v662
    %v671 = vunpack.c.l.s4 1983009808
    %v672 = vunpack.c.0.s8 %v671
    %v673 = vlaneseq
    %v674 = vshrl.u32 %v673, 7
    %v675 = vsub.s32 %v672, %v674
    %v676 = vrot.slane %v662, %v675
    %v678 = vunpack.c.l.s4 1983009808
    %v679 = vunpack.c.0.s8 %v678
    %v680 = vlaneseq
    %v681 = vshrl.u32 %v680, 7
    %v682 = vsub.s32 %v679, %v681
    %v683 = vrot.slane %v669, %v682
    %v684 = vcombine.high %v676, %v676
    %v685 = vcombine.high %v683, %v683
    %686 = vrot.lane.b32.xlu0 %v676, 64
    %v687 = vpop.permute.xlu0 %686
    %688 = vrot.lane.b32.xlu0 %v684, 64
    %v689 = vpop.permute.xlu0 %688
    %690 = vrot.lane.b32.xlu0 %v683, 64
    %v691 = vpop.permute.xlu0 %690
    %692 = vrot.lane.b32.xlu0 %v685, 64
    %v693 = vpop.permute.xlu0 %692
    %vm698 = vcmask 542224
    %699 = vst.msk [vmem:[#allocation5] sm:$0x3] %vm698, %v687
    %700 = vst.msk [vmem:[#allocation5 + $0x6] sm:$0x3] %vm698, %v689
    %701 = vst.msk [vmem:[#allocation5 + $0xc] sm:$0x3] %vm698, %v691
    %702 = vst.msk [vmem:[#allocation5 + $0x12] sm:$0x3] %vm698, %v693
    %v703 = vand.u32 2147483647, %v668
    %vm704 = vcmp.le.f32.partialorder %v703, 0.7853982
    %vm705 = vcmp.lt.s32.totalorder %v668, 0
    %v706 = vand.u32 %v668, 2139095040
    %v707 = vshrl.u32 %v706, 23
    %v708 = vsub.s32 %v707, 127
    %v709 = vand.u32 2147483647, %v668
    %v710 = vand.u32 %v709, 8388607
    %v711 = vor.u32 %v710, 8388608
    %v712 = vsub.s32 0, %v711
    %v713 = vadd.s32 %v708, 1
    %vm714 = vcmp.gt.s32.totalorder %v713, 0
    %v715 = vsel %vm714, %v713, 0
    %v716 = vshrl.u32 %v715, 5
    %v717 = vand.u32 %v715, 31
    %v718 = vsub.s32 32, %v717
    %v719 = vshrl.u32 683565275, %v718
    %v720 = vshll.u32 683565275, %v717
    %v721 = vshrl.u32 2475754826, %v718
    %v722 = vor.u32 %v720, %v721
    %v723 = vshll.u32 2475754826, %v717
    %v724 = vshrl.u32 2131351028, %v718
    %v725 = vor.u32 %v723, %v724
    %v726 = vshll.u32 2131351028, %v717
    %v727 = vshrl.u32 2102212464, %v718
    %v728 = vor.u32 %v726, %v727
    %v729 = vshll.u32 2102212464, %v717
    %v730 = vshrl.u32 920167782, %v718
    %v731 = vor.u32 %v729, %v730
    %v732 = vshll.u32 920167782, %v717
    %v733 = vshrl.u32 1326507024, %v718
    %v734 = vor.u32 %v732, %v733
    %vm735 = vcmp.lt.s32.totalorder %v716, 1
    %vm736 = vcmp.lt.s32.totalorder %v716, 2
    %vm737 = vcmp.lt.s32.totalorder %v716, 3
    %vm738 = vcmp.lt.s32.totalorder %v716, 4
    %v739 = vsel %vm735, %v719, %v722
    %v740 = vsel %vm738, %v728, 2102212464
    %v741 = vsel %vm737, %v725, %v740
    %v742 = vsel %vm736, %v739, %v741
    %v743 = vsel %vm735, %v722, %v725
    %v744 = vsel %vm738, %v731, 920167782
    %v745 = vsel %vm737, %v728, %v744
    %v746 = vsel %vm736, %v743, %v745
    %v747 = vsel %vm735, %v725, %v728
    %v748 = vsel %vm738, %v734, 1326507024
    %v749 = vsel %vm737, %v731, %v748
    %v750 = vsel %vm736, %v747, %v749
    %v751 = vshll.u32 %v711, 8
    %v752 = vmul.u32.u64.compose %v751, %v750
    %v753 = vextract.low.u32 %v752
    %v754 = vextract.high.u32 %v752
    %v755 = vmul.u32.u64.compose %v751, %v746
    %v756 = vextract.low.u32 %v755
    %v757 = vextract.high.u32 %v755
    %v758 = vmul.u32 %v751, %v742
    %v759 = vadd.s32 %v754, %v756
    %vm760 = vc.u32 %v754, %v756
    %v761 = vadd.s32 %v757, 1
    %v762 = vsel %vm760, %v761, %v757
    %v763 = vadd.s32 %v758, %v762
    %v764 = vadd.s32 %v763, 536870912
    %v765 = vshrl.u32 %v764, 30
    %v766 = vshll.u32 %v765, 30
    %v767 = vsub.s32 %v763, %v766
    %vm768 = vcmp.lt.s32.totalorder %v767, 0
    %v769 = vsub.s32 0, %v767
    %v770 = vsel %vm768, %v769, %v767
    %v771 = vclz %v770
    %v772 = vsub.s32 %v771, 2
    %vm773 = vcmp.gt.s32.totalorder 0, %v772
    %v774 = vsel %vm773, 0, %v772
    %v775 = vsub.s32 32, %v774
    %v776 = vshll.u32 %v767, %v774
    %v777 = vshrl.u32 %v759, %v775
    %v778 = vor.u32 %v776, %v777
    %v779 = vsub.s32 4294967266, %v774
    %v780 = vadd.s32 %v779, 127
    %v781 = vshll.u32 %v780, 23
    %v782 = vor.u32 4788187, %v781
    %v783 = vand.u32 2147483647, %v782
    %v785 = vcvt.s32.f32 %v778
    %v786 = vmul.f32 %v785, %v783
    %v787 = vxor.u32 %v786, 2147483648
    %v788 = vsel %vm705, %v787, %v786
    %v789 = vsub.s32 4, %v765
    %v790 = vsel %vm705, %v789, %v765
    %v791 = vsel %vm704, %v668, %v788
    %v792 = vsel %vm704, 0, %v790
    %v793 = vcosq.f32.pop %v791
    %v794 = vsinq.f32.pop %v791
    %vm795 = vweird.f32 %v668
    %v796 = vadd.s32 %v792, 3
    %v797 = vand.u32 %v796, 3
    %vm798 = vcmp.lt.s32.totalorder %v797, 2
    %vm799 = vcmp.eq.s32.totalorder %v797, 0
    %v800 = vxor.u32 %v794, 2147483648
    %v801 = vsel %vm799, %v793, %v800
    %vm802 = vcmp.eq.s32.totalorder %v797, 2
    %v803 = vxor.u32 %v793, 2147483648
    %v804 = vsel %vm802, %v803, %v794
    %v805 = vsel %vm798, %v801, %v804
    %v806 = vsel %vm795, nan, %v805
    %v808 = vcombine.high %v806, %v806
    %v810 = vunpack.c.l.s4 1983009808
    %v811 = vunpack.c.0.s8 %v810
    %v812 = vlaneseq
    %v813 = vshrl.u32 %v812, 7
    %v814 = vsub.s32 %v811, %v813
    %v815 = vrot.slane %v806, %v814
    %v817 = vunpack.c.l.s4 1983009808
    %v818 = vunpack.c.0.s8 %v817
    %v819 = vlaneseq
    %v820 = vshrl.u32 %v819, 7
    %v821 = vsub.s32 %v818, %v820
    %v822 = vrot.slane %v808, %v821
    %v823 = vcombine.high %v815, %v815
    %v824 = vcombine.high %v822, %v822
    %825 = vrot.lane.b32.xlu0 %v815, 67
    %v826 = vpop.permute.xlu0 %825
    %827 = vrot.lane.b32.xlu0 %v823, 67
    %v828 = vpop.permute.xlu0 %827
    %829 = vrot.lane.b32.xlu0 %v822, 67
    %v830 = vpop.permute.xlu0 %829
    %831 = vrot.lane.b32.xlu0 %v824, 67
    %v832 = vpop.permute.xlu0 %831
    %vm837 = vcmask 673304
    %838 = vst.msk [vmem:[#allocation5] sm:$0x3] %vm837, %v826
    %839 = vst.msk [vmem:[#allocation5 + $0x6] sm:$0x3] %vm837, %v828
    %840 = vst.msk [vmem:[#allocation5 + $0xc] sm:$0x3] %vm837, %v830
    %841 = vst.msk [vmem:[#allocation5 + $0x12] sm:$0x3] %vm837, %v832
    %v842 = vand.u32 2147483647, %v668
    %vm843 = vcmp.le.f32.partialorder %v842, 0.7853982
    %vm844 = vcmp.lt.s32.totalorder %v668, 0
    %v845 = vand.u32 %v668, 2139095040
    %v846 = vshrl.u32 %v845, 23
    %v847 = vsub.s32 %v846, 127
    %v848 = vand.u32 2147483647, %v668
    %v849 = vand.u32 %v848, 8388607
    %v850 = vor.u32 %v849, 8388608
    %v851 = vsub.s32 0, %v850
    %v852 = vadd.s32 %v847, 1
    %vm853 = vcmp.gt.s32.totalorder %v852, 0
    %v854 = vsel %vm853, %v852, 0
    %v855 = vshrl.u32 %v854, 5
    %v856 = vand.u32 %v854, 31
    %v857 = vsub.s32 32, %v856
    %v858 = vshrl.u32 683565275, %v857
    %v859 = vshll.u32 683565275, %v856
    %v860 = vshrl.u32 2475754826, %v857
    %v861 = vor.u32 %v859, %v860
    %v862 = vshll.u32 2475754826, %v856
    %v863 = vshrl.u32 2131351028, %v857
    %v864 = vor.u32 %v862, %v863
    %v865 = vshll.u32 2131351028, %v856
    %v866 = vshrl.u32 2102212464, %v857
    %v867 = vor.u32 %v865, %v866
    %v868 = vshll.u32 2102212464, %v856
    %v869 = vshrl.u32 920167782, %v857
    %v870 = vor.u32 %v868, %v869
    %v871 = vshll.u32 920167782, %v856
    %v872 = vshrl.u32 1326507024, %v857
    %v873 = vor.u32 %v871, %v872
    %vm874 = vcmp.lt.s32.totalorder %v855, 1
    %vm875 = vcmp.lt.s32.totalorder %v855, 2
    %vm876 = vcmp.lt.s32.totalorder %v855, 3
    %vm877 = vcmp.lt.s32.totalorder %v855, 4
    %v878 = vsel %vm874, %v858, %v861
    %v879 = vsel %vm877, %v867, 2102212464
    %v880 = vsel %vm876, %v864, %v879
    %v881 = vsel %vm875, %v878, %v880
    %v882 = vsel %vm874, %v861, %v864
    %v883 = vsel %vm877, %v870, 920167782
    %v884 = vsel %vm876, %v867, %v883
    %v885 = vsel %vm875, %v882, %v884
    %v886 = vsel %vm874, %v864, %v867
    %v887 = vsel %vm877, %v873, 1326507024
    %v888 = vsel %vm876, %v870, %v887
    %v889 = vsel %vm875, %v886, %v888
    %v890 = vshll.u32 %v850, 8
    %v891 = vmul.u32.u64.compose %v890, %v889
    %v892 = vextract.low.u32 %v891
    %v893 = vextract.high.u32 %v891
    %v894 = vmul.u32.u64.compose %v890, %v885
    %v895 = vextract.low.u32 %v894
    %v896 = vextract.high.u32 %v894
    %v897 = vmul.u32 %v890, %v881
    %v898 = vadd.s32 %v893, %v895
    %vm899 = vc.u32 %v893, %v895
    %v900 = vadd.s32 %v896, 1
    %v901 = vsel %vm899, %v900, %v896
    %v902 = vadd.s32 %v897, %v901
    %v903 = vadd.s32 %v902, 536870912
    %v904 = vshrl.u32 %v903, 30
    %v905 = vshll.u32 %v904, 30
    %v906 = vsub.s32 %v902, %v905
    %vm907 = vcmp.lt.s32.totalorder %v906, 0
    %v908 = vsub.s32 0, %v906
    %v909 = vsel %vm907, %v908, %v906
    %v910 = vclz %v909
    %v911 = vsub.s32 %v910, 2
    %vm912 = vcmp.gt.s32.totalorder 0, %v911
    %v913 = vsel %vm912, 0, %v911
    %v914 = vsub.s32 32, %v913
    %v915 = vshll.u32 %v906, %v913
    %v916 = vshrl.u32 %v898, %v914
    %v917 = vor.u32 %v915, %v916
    %v918 = vsub.s32 4294967266, %v913
    %v919 = vadd.s32 %v918, 127
    %v920 = vshll.u32 %v919, 23
    %v921 = vor.u32 4788187, %v920
    %v922 = vand.u32 2147483647, %v921
    %v924 = vcvt.s32.f32 %v917
    %v925 = vmul.f32 %v924, %v922
    %v926 = vxor.u32 %v925, 2147483648
    %v927 = vsel %vm844, %v926, %v925
    %v928 = vsub.s32 4, %v904
    %v929 = vsel %vm844, %v928, %v904
    %v930 = vsel %vm843, %v668, %v927
    %v931 = vsel %vm843, 0, %v929
    %v932 = vcosq.f32.pop %v930
    %v933 = vsinq.f32.pop %v930
    %vm934 = vweird.f32 %v668
    %v935 = vand.u32 %v931, 3
    %vm936 = vcmp.lt.s32.totalorder %v935, 2
    %vm937 = vcmp.eq.s32.totalorder %v935, 0
    %v938 = vxor.u32 %v933, 2147483648
    %v939 = vsel %vm937, %v932, %v938
    %vm940 = vcmp.eq.s32.totalorder %v935, 2
    %v941 = vxor.u32 %v932, 2147483648
    %v942 = vsel %vm940, %v941, %v933
    %v943 = vsel %vm936, %v939, %v942
    %v944 = vsel %vm934, nan, %v943
    %v946 = vcombine.high %v944, %v944
    %v948 = vunpack.c.l.s4 1983009808
    %v949 = vunpack.c.0.s8 %v948
    %v950 = vlaneseq
    %v951 = vshrl.u32 %v950, 7
    %v952 = vsub.s32 %v949, %v951
    %v953 = vrot.slane %v944, %v952
    %v955 = vunpack.c.l.s4 1983009808
    %v956 = vunpack.c.0.s8 %v955
    %v957 = vlaneseq
    %v958 = vshrl.u32 %v957, 7
    %v959 = vsub.s32 %v956, %v958
    %v960 = vrot.slane %v946, %v959
    %v961 = vcombine.high %v953, %v953
    %v962 = vcombine.high %v960, %v960
    %963 = vrot.lane.b32.xlu0 %v953, 83
    %v964 = vpop.permute.xlu0 %963
    %965 = vrot.lane.b32.xlu0 %v961, 83
    %v966 = vpop.permute.xlu0 %965
    %967 = vrot.lane.b32.xlu0 %v960, 83
    %v968 = vpop.permute.xlu0 %967
    %969 = vrot.lane.b32.xlu0 %v962, 83
    %v970 = vpop.permute.xlu0 %969
    %vm975 = vcmask 804504
    %976 = vst.msk [vmem:[#allocation5] sm:$0x3] %vm975, %v964
    %977 = vst.msk [vmem:[#allocation5 + $0x6] sm:$0x3] %vm975, %v966
    %978 = vst.msk [vmem:[#allocation5 + $0xc] sm:$0x3] %vm975, %v968
    %979 = vst.msk [vmem:[#allocation5 + $0x12] sm:$0x3] %vm975, %v970
    %v980 = vld [vmem:[#allocation2] sm:$0xff]
    %982 = vset.pattern.permute.xlu0 3
    %983 = vperm.xlu0 %982, %v980
    %v984 = vpop.permute.xlu0 %983
    %v986 = vmul.f32 %v984, %v38
    %v987 = vcombine.high %v980, %v980
    %v989 = vunpack.c.l.s4 1983009808
    %v990 = vunpack.c.0.s8 %v989
    %v991 = vlaneseq
    %v992 = vshrl.u32 %v991, 7
    %v993 = vsub.s32 %v990, %v992
    %v994 = vrot.slane %v980, %v993
    %v996 = vunpack.c.l.s4 1983009808
    %v997 = vunpack.c.0.s8 %v996
    %v998 = vlaneseq
    %v999 = vshrl.u32 %v998, 7
    %v1000 = vsub.s32 %v997, %v999
    %v1001 = vrot.slane %v987, %v1000
    %v1002 = vcombine.high %v994, %v994
    %v1003 = vcombine.high %v1001, %v1001
    %1004 = vrot.lane.b32.xlu0 %v994, 96
    %v1005 = vpop.permute.xlu0 %1004
    %1006 = vrot.lane.b32.xlu0 %v1002, 96
    %v1007 = vpop.permute.xlu0 %1006
    %1008 = vrot.lane.b32.xlu0 %v1001, 96
    %v1009 = vpop.permute.xlu0 %1008
    %1010 = vrot.lane.b32.xlu0 %v1003, 96
    %v1011 = vpop.permute.xlu0 %1010
    %vm1016 = vcmask 812824
    %1017 = vst.msk [vmem:[#allocation5] sm:$0x3] %vm1016, %v1005
    %1018 = vst.msk [vmem:[#allocation5 + $0x6] sm:$0x3] %vm1016, %v1007
    %1019 = vst.msk [vmem:[#allocation5 + $0xc] sm:$0x3] %vm1016, %v1009
    %1020 = vst.msk [vmem:[#allocation5 + $0x12] sm:$0x3] %vm1016, %v1011
    %v1021 = vand.u32 2147483647, %v986
    %vm1022 = vcmp.le.f32.partialorder %v1021, 0.7853982
    %vm1023 = vcmp.lt.s32.totalorder %v986, 0
    %v1024 = vand.u32 %v986, 2139095040
    %v1025 = vshrl.u32 %v1024, 23
    %v1026 = vsub.s32 %v1025, 127
    %v1027 = vand.u32 2147483647, %v986
    %v1028 = vand.u32 %v1027, 8388607
    %v1029 = vor.u32 %v1028, 8388608
    %v1030 = vsub.s32 0, %v1029
    %v1031 = vadd.s32 %v1026, 1
    %vm1032 = vcmp.gt.s32.totalorder %v1031, 0
    %v1033 = vsel %vm1032, %v1031, 0
    %v1034 = vshrl.u32 %v1033, 5
    %v1035 = vand.u32 %v1033, 31
    %v1036 = vsub.s32 32, %v1035
    %v1037 = vshrl.u32 683565275, %v1036
    %v1038 = vshll.u32 683565275, %v1035
    %v1039 = vshrl.u32 2475754826, %v1036
    %v1040 = vor.u32 %v1038, %v1039
    %v1041 = vshll.u32 2475754826, %v1035
    %v1042 = vshrl.u32 2131351028, %v1036
    %v1043 = vor.u32 %v1041, %v1042
    %v1044 = vshll.u32 2131351028, %v1035
    %v1045 = vshrl.u32 2102212464, %v1036
    %v1046 = vor.u32 %v1044, %v1045
    %v1047 = vshll.u32 2102212464, %v1035
    %v1048 = vshrl.u32 920167782, %v1036
    %v1049 = vor.u32 %v1047, %v1048
    %v1050 = vshll.u32 920167782, %v1035
    %v1051 = vshrl.u32 1326507024, %v1036
    %v1052 = vor.u32 %v1050, %v1051
    %vm1053 = vcmp.lt.s32.totalorder %v1034, 1
    %vm1054 = vcmp.lt.s32.totalorder %v1034, 2
    %vm1055 = vcmp.lt.s32.totalorder %v1034, 3
    %vm1056 = vcmp.lt.s32.totalorder %v1034, 4
    %v1057 = vsel %vm1053, %v1037, %v1040
    %v1058 = vsel %vm1056, %v1046, 2102212464
    %v1059 = vsel %vm1055, %v1043, %v1058
    %v1060 = vsel %vm1054, %v1057, %v1059
    %v1061 = vsel %vm1053, %v1040, %v1043
    %v1062 = vsel %vm1056, %v1049, 920167782
    %v1063 = vsel %vm1055, %v1046, %v1062
    %v1064 = vsel %vm1054, %v1061, %v1063
    %v1065 = vsel %vm1053, %v1043, %v1046
    %v1066 = vsel %vm1056, %v1052, 1326507024
    %v1067 = vsel %vm1055, %v1049, %v1066
    %v1068 = vsel %vm1054, %v1065, %v1067
    %v1069 = vshll.u32 %v1029, 8
    %v1070 = vmul.u32.u64.compose %v1069, %v1068
    %v1071 = vextract.low.u32 %v1070
    %v1072 = vextract.high.u32 %v1070
    %v1073 = vmul.u32.u64.compose %v1069, %v1064
    %v1074 = vextract.low.u32 %v1073
    %v1075 = vextract.high.u32 %v1073
    %v1076 = vmul.u32 %v1069, %v1060
    %v1077 = vadd.s32 %v1072, %v1074
    %vm1078 = vc.u32 %v1072, %v1074
    %v1079 = vadd.s32 %v1075, 1
    %v1080 = vsel %vm1078, %v1079, %v1075
    %v1081 = vadd.s32 %v1076, %v1080
    %v1082 = vadd.s32 %v1081, 536870912
    %v1083 = vshrl.u32 %v1082, 30
    %v1084 = vshll.u32 %v1083, 30
    %v1085 = vsub.s32 %v1081, %v1084
    %vm1086 = vcmp.lt.s32.totalorder %v1085, 0
    %v1087 = vsub.s32 0, %v1085
    %v1088 = vsel %vm1086, %v1087, %v1085
    %v1089 = vclz %v1088
    %v1090 = vsub.s32 %v1089, 2
    %vm1091 = vcmp.gt.s32.totalorder 0, %v1090
    %v1092 = vsel %vm1091, 0, %v1090
    %v1093 = vsub.s32 32, %v1092
    %v1094 = vshll.u32 %v1085, %v1092
    %v1095 = vshrl.u32 %v1077, %v1093
    %v1096 = vor.u32 %v1094, %v1095
    %v1097 = vsub.s32 4294967266, %v1092
    %v1098 = vadd.s32 %v1097, 127
    %v1099 = vshll.u32 %v1098, 23
    %v1100 = vor.u32 4788187, %v1099
    %v1101 = vand.u32 2147483647, %v1100
    %v1103 = vcvt.s32.f32 %v1096
    %v1104 = vmul.f32 %v1103, %v1101
    %v1105 = vxor.u32 %v1104, 2147483648
    %v1106 = vsel %vm1023, %v1105, %v1104
    %v1107 = vsub.s32 4, %v1083
    %v1108 = vsel %vm1023, %v1107, %v1083
    %v1109 = vsel %vm1022, %v986, %v1106
    %v1110 = vsel %vm1022, 0, %v1108
    %v1111 = vcosq.f32.pop %v1109
    %v1112 = vsinq.f32.pop %v1109
    %vm1113 = vweird.f32 %v986
    %v1114 = vadd.s32 %v1110, 3
    %v1115 = vand.u32 %v1114, 3
    %vm1116 = vcmp.lt.s32.totalorder %v1115, 2
    %vm1117 = vcmp.eq.s32.totalorder %v1115, 0
    %v1118 = vxor.u32 %v1112, 2147483648
    %v1119 = vsel %vm1117, %v1111, %v1118
    %vm1120 = vcmp.eq.s32.totalorder %v1115, 2
    %v1121 = vxor.u32 %v1111, 2147483648
    %v1122 = vsel %vm1120, %v1121, %v1112
    %v1123 = vsel %vm1116, %v1119, %v1122
    %v1124 = vsel %vm1113, nan, %v1123
    %v1126 = vcombine.high %v1124, %v1124
    %v1128 = vunpack.c.l.s4 1983009808
    %v1129 = vunpack.c.0.s8 %v1128
    %v1130 = vlaneseq
    %v1131 = vshrl.u32 %v1130, 7
    %v1132 = vsub.s32 %v1129, %v1131
    %v1133 = vrot.slane %v1124, %v1132
    %v1135 = vunpack.c.l.s4 1983009808
    %v1136 = vunpack.c.0.s8 %v1135
    %v1137 = vlaneseq
    %v1138 = vshrl.u32 %v1137, 7
    %v1139 = vsub.s32 %v1136, %v1138
    %v1140 = vrot.slane %v1126, %v1139
    %v1141 = vcombine.high %v1133, %v1133
    %v1142 = vcombine.high %v1140, %v1140
    %1143 = vrot.lane.b32.xlu0 %v1133, 100
    %v1144 = vpop.permute.xlu0 %1143
    %1145 = vrot.lane.b32.xlu0 %v1141, 100
    %v1146 = vpop.permute.xlu0 %1145
    %1147 = vrot.lane.b32.xlu0 %v1140, 100
    %v1148 = vpop.permute.xlu0 %1147
    %1149 = vrot.lane.b32.xlu0 %v1142, 100
    %v1150 = vpop.permute.xlu0 %1149
    %vm1155 = vcmask 943904
    %1156 = vst.msk [vmem:[#allocation5] sm:$0x3] %vm1155, %v1144
    %1157 = vst.msk [vmem:[#allocation5 + $0x6] sm:$0x3] %vm1155, %v1146
    %1158 = vst.msk [vmem:[#allocation5 + $0xc] sm:$0x3] %vm1155, %v1148
    %1159 = vst.msk [vmem:[#allocation5 + $0x12] sm:$0x3] %vm1155, %v1150
    %v1160 = vand.u32 2147483647, %v986
    %vm1161 = vcmp.le.f32.partialorder %v1160, 0.7853982
    %vm1162 = vcmp.lt.s32.totalorder %v986, 0
    %v1163 = vand.u32 %v986, 2139095040
    %v1164 = vshrl.u32 %v1163, 23
    %v1165 = vsub.s32 %v1164, 127
    %v1166 = vand.u32 2147483647, %v986
    %v1167 = vand.u32 %v1166, 8388607
    %v1168 = vor.u32 %v1167, 8388608
    %v1169 = vsub.s32 0, %v1168
    %v1170 = vadd.s32 %v1165, 1
    %vm1171 = vcmp.gt.s32.totalorder %v1170, 0
    %v1172 = vsel %vm1171, %v1170, 0
    %v1173 = vshrl.u32 %v1172, 5
    %v1174 = vand.u32 %v1172, 31
    %v1175 = vsub.s32 32, %v1174
    %v1176 = vshrl.u32 683565275, %v1175
    %v1177 = vshll.u32 683565275, %v1174
    %v1178 = vshrl.u32 2475754826, %v1175
    %v1179 = vor.u32 %v1177, %v1178
    %v1180 = vshll.u32 2475754826, %v1174
    %v1181 = vshrl.u32 2131351028, %v1175
    %v1182 = vor.u32 %v1180, %v1181
    %v1183 = vshll.u32 2131351028, %v1174
    %v1184 = vshrl.u32 2102212464, %v1175
    %v1185 = vor.u32 %v1183, %v1184
    %v1186 = vshll.u32 2102212464, %v1174
    %v1187 = vshrl.u32 920167782, %v1175
    %v1188 = vor.u32 %v1186, %v1187
    %v1189 = vshll.u32 920167782, %v1174
    %v1190 = vshrl.u32 1326507024, %v1175
    %v1191 = vor.u32 %v1189, %v1190
    %vm1192 = vcmp.lt.s32.totalorder %v1173, 1
    %vm1193 = vcmp.lt.s32.totalorder %v1173, 2
    %vm1194 = vcmp.lt.s32.totalorder %v1173, 3
    %vm1195 = vcmp.lt.s32.totalorder %v1173, 4
    %v1196 = vsel %vm1192, %v1176, %v1179
    %v1197 = vsel %vm1195, %v1185, 2102212464
    %v1198 = vsel %vm1194, %v1182, %v1197
    %v1199 = vsel %vm1193, %v1196, %v1198
    %v1200 = vsel %vm1192, %v1179, %v1182
    %v1201 = vsel %vm1195, %v1188, 920167782
    %v1202 = vsel %vm1194, %v1185, %v1201
    %v1203 = vsel %vm1193, %v1200, %v1202
    %v1204 = vsel %vm1192, %v1182, %v1185
    %v1205 = vsel %vm1195, %v1191, 1326507024
    %v1206 = vsel %vm1194, %v1188, %v1205
    %v1207 = vsel %vm1193, %v1204, %v1206
    %v1208 = vshll.u32 %v1168, 8
    %v1209 = vmul.u32.u64.compose %v1208, %v1207
    %v1210 = vextract.low.u32 %v1209
    %v1211 = vextract.high.u32 %v1209
    %v1212 = vmul.u32.u64.compose %v1208, %v1203
    %v1213 = vextract.low.u32 %v1212
    %v1214 = vextract.high.u32 %v1212
    %v1215 = vmul.u32 %v1208, %v1199
    %v1216 = vadd.s32 %v1211, %v1213
    %vm1217 = vc.u32 %v1211, %v1213
    %v1218 = vadd.s32 %v1214, 1
    %v1219 = vsel %vm1217, %v1218, %v1214
    %v1220 = vadd.s32 %v1215, %v1219
    %v1221 = vadd.s32 %v1220, 536870912
    %v1222 = vshrl.u32 %v1221, 30
    %v1223 = vshll.u32 %v1222, 30
    %v1224 = vsub.s32 %v1220, %v1223
    %vm1225 = vcmp.lt.s32.totalorder %v1224, 0
    %v1226 = vsub.s32 0, %v1224
    %v1227 = vsel %vm1225, %v1226, %v1224
    %v1228 = vclz %v1227
    %v1229 = vsub.s32 %v1228, 2
    %vm1230 = vcmp.gt.s32.totalorder 0, %v1229
    %v1231 = vsel %vm1230, 0, %v1229
    %v1232 = vsub.s32 32, %v1231
    %v1233 = vshll.u32 %v1224, %v1231
    %v1234 = vshrl.u32 %v1216, %v1232
    %v1235 = vor.u32 %v1233, %v1234
    %v1236 = vsub.s32 4294967266, %v1231
    %v1237 = vadd.s32 %v1236, 127
    %v1238 = vshll.u32 %v1237, 23
    %v1239 = vor.u32 4788187, %v1238
    %v1240 = vand.u32 2147483647, %v1239
    %v1242 = vcvt.s32.f32 %v1235
    %v1243 = vmul.f32 %v1242, %v1240
    %v1244 = vxor.u32 %v1243, 2147483648
    %v1245 = vsel %vm1162, %v1244, %v1243
    %v1246 = vsub.s32 4, %v1222
    %v1247 = vsel %vm1162, %v1246, %v1222
    %v1248 = vsel %vm1161, %v986, %v1245
    %v1249 = vsel %vm1161, 0, %v1247
    %v1250 = vcosq.f32.pop %v1248
    %v1251 = vsinq.f32.pop %v1248
    %vm1252 = vweird.f32 %v986
    %v1253 = vand.u32 %v1249, 3
    %vm1254 = vcmp.lt.s32.totalorder %v1253, 2
    %vm1255 = vcmp.eq.s32.totalorder %v1253, 0
    %v1256 = vxor.u32 %v1251, 2147483648
    %v1257 = vsel %vm1255, %v1250, %v1256
    %vm1258 = vcmp.eq.s32.totalorder %v1253, 2
    %v1259 = vxor.u32 %v1250, 2147483648
    %v1260 = vsel %vm1258, %v1259, %v1251
    %v1261 = vsel %vm1254, %v1257, %v1260
    %v1262 = vsel %vm1252, nan, %v1261
    %v1264 = vcombine.high %v1262, %v1262
    %v1266 = vunpack.c.l.s4 1983009808
    %v1267 = vunpack.c.0.s8 %v1266
    %v1268 = vlaneseq
    %v1269 = vshrl.u32 %v1268, 7
    %v1270 = vsub.s32 %v1267, %v1269
    %v1271 = vrot.slane %v1262, %v1270
    %v1273 = vunpack.c.l.s4 1983009808
    %v1274 = vunpack.c.0.s8 %v1273
    %v1275 = vlaneseq
    %v1276 = vshrl.u32 %v1275, 7
    %v1277 = vsub.s32 %v1274, %v1276
    %v1278 = vrot.slane %v1264, %v1277
    %v1279 = vcombine.high %v1271, %v1271
    %v1280 = vcombine.high %v1278, %v1278
    %1281 = vrot.lane.b32.xlu0 %v1271, 116
    %v1282 = vpop.permute.xlu0 %1281
    %1283 = vrot.lane.b32.xlu0 %v1279, 116
    %v1284 = vpop.permute.xlu0 %1283
    %1285 = vrot.lane.b32.xlu0 %v1278, 116
    %v1286 = vpop.permute.xlu0 %1285
    %1287 = vrot.lane.b32.xlu0 %v1280, 116
    %v1288 = vpop.permute.xlu0 %1287
    %v1289 = vrot.slane %v1282, 6
    %v1290 = vrot.slane %v1284, 6
    %v1291 = vrot.slane %v1286, 6
    %v1292 = vrot.slane %v1288, 6
    %vm1293 = vcmask 949248
    %v1294 = vsel %vm1293, %v1289, %v1282
    %v1295 = vsel %vm1293, %v1290, %v1284
    %v1296 = vsel %vm1293, %v1291, %v1286
    %v1297 = vsel %vm1293, %v1292, %v1288
    %vm1302 = vcmask 1042336
    %vm1303 = vcmask 27650
    %vm1304 = vmor %vm1303, %vm1302
    %1305 = vst.msk [vmem:[#allocation5] sm:$0xf] %vm1304, %v1294
    %1306 = vst.msk [vmem:[#allocation5 + $0x6] sm:$0xf] %vm1304, %v1295
    %1307 = vst.msk [vmem:[#allocation5 + $0xc] sm:$0xf] %vm1304, %v1296
    %1308 = vst.msk [vmem:[#allocation5 + $0x12] sm:$0xf] %vm1304, %v1297
    %v1309 = vld [vmem:[#allocation2] sm:$0xff]
    %1311 = vset.pattern.permute.xlu0 4
    %1312 = vperm.xlu0 %1311, %v1309
    %v1313 = vpop.permute.xlu0 %1312
    %v1315 = vmul.f32 %v1313, %v38
    %v1316 = vcombine.high %v1309, %v1309
    %v1318 = vunpack.c.l.s4 1983009808
    %v1319 = vunpack.c.0.s8 %v1318
    %v1320 = vlaneseq
    %v1321 = vshrl.u32 %v1320, 7
    %v1322 = vsub.s32 %v1319, %v1321
    %v1323 = vrot.slane %v1309, %v1322
    %v1325 = vunpack.c.l.s4 1983009808
    %v1326 = vunpack.c.0.s8 %v1325
    %v1327 = vlaneseq
    %v1328 = vshrl.u32 %v1327, 7
    %v1329 = vsub.s32 %v1326, %v1328
    %v1330 = vrot.slane %v1316, %v1329
    %v1331 = vcombine.high %v1323, %v1323
    %v1332 = vcombine.high %v1330, %v1330
    %vm1337 = vcmask 33824
    %1338 = vst.msk [vmem:[#allocation5 + $0x2] sm:$0x3] %vm1337, %v1323
    %1339 = vst.msk [vmem:[#allocation5 + $0x8] sm:$0x3] %vm1337, %v1331
    %1340 = vst.msk [vmem:[#allocation5 + $0xe] sm:$0x3] %vm1337, %v1330
    %1341 = vst.msk [vmem:[#allocation5 + $0x14] sm:$0x3] %vm1337, %v1332
    %v1342 = vand.u32 2147483647, %v1315
    %vm1343 = vcmp.le.f32.partialorder %v1342, 0.7853982
    %vm1344 = vcmp.lt.s32.totalorder %v1315, 0
    %v1345 = vand.u32 %v1315, 2139095040
    %v1346 = vshrl.u32 %v1345, 23
    %v1347 = vsub.s32 %v1346, 127
    %v1348 = vand.u32 2147483647, %v1315
    %v1349 = vand.u32 %v1348, 8388607
    %v1350 = vor.u32 %v1349, 8388608
    %v1351 = vsub.s32 0, %v1350
    %v1352 = vadd.s32 %v1347, 1
    %vm1353 = vcmp.gt.s32.totalorder %v1352, 0
    %v1354 = vsel %vm1353, %v1352, 0
    %v1355 = vshrl.u32 %v1354, 5
    %v1356 = vand.u32 %v1354, 31
    %v1357 = vsub.s32 32, %v1356
    %v1358 = vshrl.u32 683565275, %v1357
    %v1359 = vshll.u32 683565275, %v1356
    %v1360 = vshrl.u32 2475754826, %v1357
    %v1361 = vor.u32 %v1359, %v1360
    %v1362 = vshll.u32 2475754826, %v1356
    %v1363 = vshrl.u32 2131351028, %v1357
    %v1364 = vor.u32 %v1362, %v1363
    %v1365 = vshll.u32 2131351028, %v1356
    %v1366 = vshrl.u32 2102212464, %v1357
    %v1367 = vor.u32 %v1365, %v1366
    %v1368 = vshll.u32 2102212464, %v1356
    %v1369 = vshrl.u32 920167782, %v1357
    %v1370 = vor.u32 %v1368, %v1369
    %v1371 = vshll.u32 920167782, %v1356
    %v1372 = vshrl.u32 1326507024, %v1357
    %v1373 = vor.u32 %v1371, %v1372
    %vm1374 = vcmp.lt.s32.totalorder %v1355, 1
    %vm1375 = vcmp.lt.s32.totalorder %v1355, 2
    %vm1376 = vcmp.lt.s32.totalorder %v1355, 3
    %vm1377 = vcmp.lt.s32.totalorder %v1355, 4
    %v1378 = vsel %vm1374, %v1358, %v1361
    %v1379 = vsel %vm1377, %v1367, 2102212464
    %v1380 = vsel %vm1376, %v1364, %v1379
    %v1381 = vsel %vm1375, %v1378, %v1380
    %v1382 = vsel %vm1374, %v1361, %v1364
    %v1383 = vsel %vm1377, %v1370, 920167782
    %v1384 = vsel %vm1376, %v1367, %v1383
    %v1385 = vsel %vm1375, %v1382, %v1384
    %v1386 = vsel %vm1374, %v1364, %v1367
    %v1387 = vsel %vm1377, %v1373, 1326507024
    %v1388 = vsel %vm1376, %v1370, %v1387
    %v1389 = vsel %vm1375, %v1386, %v1388
    %v1390 = vshll.u32 %v1350, 8
    %v1391 = vmul.u32.u64.compose %v1390, %v1389
    %v1392 = vextract.low.u32 %v1391
    %v1393 = vextract.high.u32 %v1391
    %v1394 = vmul.u32.u64.compose %v1390, %v1385
    %v1395 = vextract.low.u32 %v1394
    %v1396 = vextract.high.u32 %v1394
    %v1397 = vmul.u32 %v1390, %v1381
    %v1398 = vadd.s32 %v1393, %v1395
    %vm1399 = vc.u32 %v1393, %v1395
    %v1400 = vadd.s32 %v1396, 1
    %v1401 = vsel %vm1399, %v1400, %v1396
    %v1402 = vadd.s32 %v1397, %v1401
    %v1403 = vadd.s32 %v1402, 536870912
    %v1404 = vshrl.u32 %v1403, 30
    %v1405 = vshll.u32 %v1404, 30
    %v1406 = vsub.s32 %v1402, %v1405
    %vm1407 = vcmp.lt.s32.totalorder %v1406, 0
    %v1408 = vsub.s32 0, %v1406
    %v1409 = vsel %vm1407, %v1408, %v1406
    %v1410 = vclz %v1409
    %v1411 = vsub.s32 %v1410, 2
    %vm1412 = vcmp.gt.s32.totalorder 0, %v1411
    %v1413 = vsel %vm1412, 0, %v1411
    %v1414 = vsub.s32 32, %v1413
    %v1415 = vshll.u32 %v1406, %v1413
    %v1416 = vshrl.u32 %v1398, %v1414
    %v1417 = vor.u32 %v1415, %v1416
    %v1418 = vsub.s32 4294967266, %v1413
    %v1419 = vadd.s32 %v1418, 127
    %v1420 = vshll.u32 %v1419, 23
    %v1421 = vor.u32 4788187, %v1420
    %v1422 = vand.u32 2147483647, %v1421
    %v1424 = vcvt.s32.f32 %v1417
    %v1425 = vmul.f32 %v1424, %v1422
    %v1426 = vxor.u32 %v1425, 2147483648
    %v1427 = vsel %vm1344, %v1426, %v1425
    %v1428 = vsub.s32 4, %v1404
    %v1429 = vsel %vm1344, %v1428, %v1404
    %v1430 = vsel %vm1343, %v1315, %v1427
    %v1431 = vsel %vm1343, 0, %v1429
    %v1432 = vcosq.f32.pop %v1430
    %v1433 = vsinq.f32.pop %v1430
    %vm1434 = vweird.f32 %v1315
    %v1435 = vadd.s32 %v1431, 3
    %v1436 = vand.u32 %v1435, 3
    %vm1437 = vcmp.lt.s32.totalorder %v1436, 2
    %vm1438 = vcmp.eq.s32.totalorder %v1436, 0
    %v1439 = vxor.u32 %v1433, 2147483648
    %v1440 = vsel %vm1438, %v1432, %v1439
    %vm1441 = vcmp.eq.s32.totalorder %v1436, 2
    %v1442 = vxor.u32 %v1432, 2147483648
    %v1443 = vsel %vm1441, %v1442, %v1433
    %v1444 = vsel %vm1437, %v1440, %v1443
    %v1445 = vsel %vm1434, nan, %v1444
    %v1447 = vcombine.high %v1445, %v1445
    %v1449 = vunpack.c.l.s4 1983009808
    %v1450 = vunpack.c.0.s8 %v1449
    %v1451 = vlaneseq
    %v1452 = vshrl.u32 %v1451, 7
    %v1453 = vsub.s32 %v1450, %v1452
    %v1454 = vrot.slane %v1445, %v1453
    %v1456 = vunpack.c.l.s4 1983009808
    %v1457 = vunpack.c.0.s8 %v1456
    %v1458 = vlaneseq
    %v1459 = vshrl.u32 %v1458, 7
    %v1460 = vsub.s32 %v1457, %v1459
    %v1461 = vrot.slane %v1447, %v1460
    %v1462 = vcombine.high %v1454, %v1454
    %v1463 = vcombine.high %v1461, %v1461
    %1464 = vrot.lane.b32.xlu0 %v1454, 5
    %v1465 = vpop.permute.xlu0 %1464
    %1466 = vrot.lane.b32.xlu0 %v1462, 5
    %v1467 = vpop.permute.xlu0 %1466
    %1468 = vrot.lane.b32.xlu0 %v1461, 5
    %v1469 = vpop.permute.xlu0 %1468
    %1470 = vrot.lane.b32.xlu0 %v1463, 5
    %v1471 = vpop.permute.xlu0 %1470
    %vm1476 = vcmask 164904
    %1477 = vst.msk [vmem:[#allocation5 + $0x2] sm:$0x3] %vm1476, %v1465
    %1478 = vst.msk [vmem:[#allocation5 + $0x8] sm:$0x3] %vm1476, %v1467
    %1479 = vst.msk [vmem:[#allocation5 + $0xe] sm:$0x3] %vm1476, %v1469
    %1480 = vst.msk [vmem:[#allocation5 + $0x14] sm:$0x3] %vm1476, %v1471
    %v1481 = vand.u32 2147483647, %v1315
    %vm1482 = vcmp.le.f32.partialorder %v1481, 0.7853982
    %vm1483 = vcmp.lt.s32.totalorder %v1315, 0
    %v1484 = vand.u32 %v1315, 2139095040
    %v1485 = vshrl.u32 %v1484, 23
    %v1486 = vsub.s32 %v1485, 127
    %v1487 = vand.u32 2147483647, %v1315
    %v1488 = vand.u32 %v1487, 8388607
    %v1489 = vor.u32 %v1488, 8388608
    %v1490 = vsub.s32 0, %v1489
    %v1491 = vadd.s32 %v1486, 1
    %vm1492 = vcmp.gt.s32.totalorder %v1491, 0
    %v1493 = vsel %vm1492, %v1491, 0
    %v1494 = vshrl.u32 %v1493, 5
    %v1495 = vand.u32 %v1493, 31
    %v1496 = vsub.s32 32, %v1495
    %v1497 = vshrl.u32 683565275, %v1496
    %v1498 = vshll.u32 683565275, %v1495
    %v1499 = vshrl.u32 2475754826, %v1496
    %v1500 = vor.u32 %v1498, %v1499
    %v1501 = vshll.u32 2475754826, %v1495
    %v1502 = vshrl.u32 2131351028, %v1496
    %v1503 = vor.u32 %v1501, %v1502
    %v1504 = vshll.u32 2131351028, %v1495
    %v1505 = vshrl.u32 2102212464, %v1496
    %v1506 = vor.u32 %v1504, %v1505
    %v1507 = vshll.u32 2102212464, %v1495
    %v1508 = vshrl.u32 920167782, %v1496
    %v1509 = vor.u32 %v1507, %v1508
    %v1510 = vshll.u32 920167782, %v1495
    %v1511 = vshrl.u32 1326507024, %v1496
    %v1512 = vor.u32 %v1510, %v1511
    %vm1513 = vcmp.lt.s32.totalorder %v1494, 1
    %vm1514 = vcmp.lt.s32.totalorder %v1494, 2
    %vm1515 = vcmp.lt.s32.totalorder %v1494, 3
    %vm1516 = vcmp.lt.s32.totalorder %v1494, 4
    %v1517 = vsel %vm1513, %v1497, %v1500
    %v1518 = vsel %vm1516, %v1506, 2102212464
    %v1519 = vsel %vm1515, %v1503, %v1518
    %v1520 = vsel %vm1514, %v1517, %v1519
    %v1521 = vsel %vm1513, %v1500, %v1503
    %v1522 = vsel %vm1516, %v1509, 920167782
    %v1523 = vsel %vm1515, %v1506, %v1522
    %v1524 = vsel %vm1514, %v1521, %v1523
    %v1525 = vsel %vm1513, %v1503, %v1506
    %v1526 = vsel %vm1516, %v1512, 1326507024
    %v1527 = vsel %vm1515, %v1509, %v1526
    %v1528 = vsel %vm1514, %v1525, %v1527
    %v1529 = vshll.u32 %v1489, 8
    %v1530 = vmul.u32.u64.compose %v1529, %v1528
    %v1531 = vextract.low.u32 %v1530
    %v1532 = vextract.high.u32 %v1530
    %v1533 = vmul.u32.u64.compose %v1529, %v1524
    %v1534 = vextract.low.u32 %v1533
    %v1535 = vextract.high.u32 %v1533
    %v1536 = vmul.u32 %v1529, %v1520
    %v1537 = vadd.s32 %v1532, %v1534
    %vm1538 = vc.u32 %v1532, %v1534
    %v1539 = vadd.s32 %v1535, 1
    %v1540 = vsel %vm1538, %v1539, %v1535
    %v1541 = vadd.s32 %v1536, %v1540
    %v1542 = vadd.s32 %v1541, 536870912
    %v1543 = vshrl.u32 %v1542, 30
    %v1544 = vshll.u32 %v1543, 30
    %v1545 = vsub.s32 %v1541, %v1544
    %vm1546 = vcmp.lt.s32.totalorder %v1545, 0
    %v1547 = vsub.s32 0, %v1545
    %v1548 = vsel %vm1546, %v1547, %v1545
    %v1549 = vclz %v1548
    %v1550 = vsub.s32 %v1549, 2
    %vm1551 = vcmp.gt.s32.totalorder 0, %v1550
    %v1552 = vsel %vm1551, 0, %v1550
    %v1553 = vsub.s32 32, %v1552
    %v1554 = vshll.u32 %v1545, %v1552
    %v1555 = vshrl.u32 %v1537, %v1553
    %v1556 = vor.u32 %v1554, %v1555
    %v1557 = vsub.s32 4294967266, %v1552
    %v1558 = vadd.s32 %v1557, 127
    %v1559 = vshll.u32 %v1558, 23
    %v1560 = vor.u32 4788187, %v1559
    %v1561 = vand.u32 2147483647, %v1560
    %v1563 = vcvt.s32.f32 %v1556
    %v1564 = vmul.f32 %v1563, %v1561
    %v1565 = vxor.u32 %v1564, 2147483648
    %v1566 = vsel %vm1483, %v1565, %v1564
    %v1567 = vsub.s32 4, %v1543
    %v1568 = vsel %vm1483, %v1567, %v1543
    %v1569 = vsel %vm1482, %v1315, %v1566
    %v1570 = vsel %vm1482, 0, %v1568
    %v1571 = vcosq.f32.pop %v1569
    %v1572 = vsinq.f32.pop %v1569
    %vm1573 = vweird.f32 %v1315
    %v1574 = vand.u32 %v1570, 3
    %vm1575 = vcmp.lt.s32.totalorder %v1574, 2
    %vm1576 = vcmp.eq.s32.totalorder %v1574, 0
    %v1577 = vxor.u32 %v1572, 2147483648
    %v1578 = vsel %vm1576, %v1571, %v1577
    %vm1579 = vcmp.eq.s32.totalorder %v1574, 2
    %v1580 = vxor.u32 %v1571, 2147483648
    %v1581 = vsel %vm1579, %v1580, %v1572
    %v1582 = vsel %vm1575, %v1578, %v1581
    %v1583 = vsel %vm1573, nan, %v1582
    %v1585 = vcombine.high %v1583, %v1583
    %v1587 = vunpack.c.l.s4 1983009808
    %v1588 = vunpack.c.0.s8 %v1587
    %v1589 = vlaneseq
    %v1590 = vshrl.u32 %v1589, 7
    %v1591 = vsub.s32 %v1588, %v1590
    %v1592 = vrot.slane %v1583, %v1591
    %v1594 = vunpack.c.l.s4 1983009808
    %v1595 = vunpack.c.0.s8 %v1594
    %v1596 = vlaneseq
    %v1597 = vshrl.u32 %v1596, 7
    %v1598 = vsub.s32 %v1595, %v1597
    %v1599 = vrot.slane %v1585, %v1598
    %v1600 = vcombine.high %v1592, %v1592
    %v1601 = vcombine.high %v1599, %v1599
    %1602 = vrot.lane.b32.xlu0 %v1592, 21
    %v1603 = vpop.permute.xlu0 %1602
    %1604 = vrot.lane.b32.xlu0 %v1600, 21
    %v1605 = vpop.permute.xlu0 %1604
    %1606 = vrot.lane.b32.xlu0 %v1599, 21
    %v1607 = vpop.permute.xlu0 %1606
    %1608 = vrot.lane.b32.xlu0 %v1601, 21
    %v1609 = vpop.permute.xlu0 %1608
    %vm1614 = vcmask 296104
    %1615 = vst.msk [vmem:[#allocation5 + $0x2] sm:$0x3] %vm1614, %v1603
    %1616 = vst.msk [vmem:[#allocation5 + $0x8] sm:$0x3] %vm1614, %v1605
    %1617 = vst.msk [vmem:[#allocation5 + $0xe] sm:$0x3] %vm1614, %v1607
    %1618 = vst.msk [vmem:[#allocation5 + $0x14] sm:$0x3] %vm1614, %v1609
    %v1619 = vld [vmem:[#allocation2] sm:$0xff]
    %1621 = vset.pattern.permute.xlu0 5
    %1622 = vperm.xlu0 %1621, %v1619
    %v1623 = vpop.permute.xlu0 %1622
    %v1625 = vmul.f32 %v1623, %v38
    %v1626 = vcombine.high %v1619, %v1619
    %v1628 = vunpack.c.l.s4 1983009808
    %v1629 = vunpack.c.0.s8 %v1628
    %v1630 = vlaneseq
    %v1631 = vshrl.u32 %v1630, 7
    %v1632 = vsub.s32 %v1629, %v1631
    %v1633 = vrot.slane %v1619, %v1632
    %v1635 = vunpack.c.l.s4 1983009808
    %v1636 = vunpack.c.0.s8 %v1635
    %v1637 = vlaneseq
    %v1638 = vshrl.u32 %v1637, 7
    %v1639 = vsub.s32 %v1636, %v1638
    %v1640 = vrot.slane %v1626, %v1639
    %v1641 = vcombine.high %v1633, %v1633
    %v1642 = vcombine.high %v1640, %v1640
    %1643 = vrot.lane.b32.xlu0 %v1633, 32
    %v1644 = vpop.permute.xlu0 %1643
    %1645 = vrot.lane.b32.xlu0 %v1641, 32
    %v1646 = vpop.permute.xlu0 %1645
    %1647 = vrot.lane.b32.xlu0 %v1640, 32
    %v1648 = vpop.permute.xlu0 %1647
    %1649 = vrot.lane.b32.xlu0 %v1642, 32
    %v1650 = vpop.permute.xlu0 %1649
    %vm1655 = vcmask 304424
    %1656 = vst.msk [vmem:[#allocation5 + $0x2] sm:$0x3] %vm1655, %v1644
    %1657 = vst.msk [vmem:[#allocation5 + $0x8] sm:$0x3] %vm1655, %v1646
    %1658 = vst.msk [vmem:[#allocation5 + $0xe] sm:$0x3] %vm1655, %v1648
    %1659 = vst.msk [vmem:[#allocation5 + $0x14] sm:$0x3] %vm1655, %v1650
    %v1660 = vand.u32 2147483647, %v1625
    %vm1661 = vcmp.le.f32.partialorder %v1660, 0.7853982
    %vm1662 = vcmp.lt.s32.totalorder %v1625, 0
    %v1663 = vand.u32 %v1625, 2139095040
    %v1664 = vshrl.u32 %v1663, 23
    %v1665 = vsub.s32 %v1664, 127
    %v1666 = vand.u32 2147483647, %v1625
    %v1667 = vand.u32 %v1666, 8388607
    %v1668 = vor.u32 %v1667, 8388608
    %v1669 = vsub.s32 0, %v1668
    %v1670 = vadd.s32 %v1665, 1
    %vm1671 = vcmp.gt.s32.totalorder %v1670, 0
    %v1672 = vsel %vm1671, %v1670, 0
    %v1673 = vshrl.u32 %v1672, 5
    %v1674 = vand.u32 %v1672, 31
    %v1675 = vsub.s32 32, %v1674
    %v1676 = vshrl.u32 683565275, %v1675
    %v1677 = vshll.u32 683565275, %v1674
    %v1678 = vshrl.u32 2475754826, %v1675
    %v1679 = vor.u32 %v1677, %v1678
    %v1680 = vshll.u32 2475754826, %v1674
    %v1681 = vshrl.u32 2131351028, %v1675
    %v1682 = vor.u32 %v1680, %v1681
    %v1683 = vshll.u32 2131351028, %v1674
    %v1684 = vshrl.u32 2102212464, %v1675
    %v1685 = vor.u32 %v1683, %v1684
    %v1686 = vshll.u32 2102212464, %v1674
    %v1687 = vshrl.u32 920167782, %v1675
    %v1688 = vor.u32 %v1686, %v1687
    %v1689 = vshll.u32 920167782, %v1674
    %v1690 = vshrl.u32 1326507024, %v1675
    %v1691 = vor.u32 %v1689, %v1690
    %vm1692 = vcmp.lt.s32.totalorder %v1673, 1
    %vm1693 = vcmp.lt.s32.totalorder %v1673, 2
    %vm1694 = vcmp.lt.s32.totalorder %v1673, 3
    %vm1695 = vcmp.lt.s32.totalorder %v1673, 4
    %v1696 = vsel %vm1692, %v1676, %v1679
    %v1697 = vsel %vm1695, %v1685, 2102212464
    %v1698 = vsel %vm1694, %v1682, %v1697
    %v1699 = vsel %vm1693, %v1696, %v1698
    %v1700 = vsel %vm1692, %v1679, %v1682
    %v1701 = vsel %vm1695, %v1688, 920167782
    %v1702 = vsel %vm1694, %v1685, %v1701
    %v1703 = vsel %vm1693, %v1700, %v1702
    %v1704 = vsel %vm1692, %v1682, %v1685
    %v1705 = vsel %vm1695, %v1691, 1326507024
    %v1706 = vsel %vm1694, %v1688, %v1705
    %v1707 = vsel %vm1693, %v1704, %v1706
    %v1708 = vshll.u32 %v1668, 8
    %v1709 = vmul.u32.u64.compose %v1708, %v1707
    %v1710 = vextract.low.u32 %v1709
    %v1711 = vextract.high.u32 %v1709
    %v1712 = vmul.u32.u64.compose %v1708, %v1703
    %v1713 = vextract.low.u32 %v1712
    %v1714 = vextract.high.u32 %v1712
    %v1715 = vmul.u32 %v1708, %v1699
    %v1716 = vadd.s32 %v1711, %v1713
    %vm1717 = vc.u32 %v1711, %v1713
    %v1718 = vadd.s32 %v1714, 1
    %v1719 = vsel %vm1717, %v1718, %v1714
    %v1720 = vadd.s32 %v1715, %v1719
    %v1721 = vadd.s32 %v1720, 536870912
    %v1722 = vshrl.u32 %v1721, 30
    %v1723 = vshll.u32 %v1722, 30
    %v1724 = vsub.s32 %v1720, %v1723
    %vm1725 = vcmp.lt.s32.totalorder %v1724, 0
    %v1726 = vsub.s32 0, %v1724
    %v1727 = vsel %vm1725, %v1726, %v1724
    %v1728 = vclz %v1727
    %v1729 = vsub.s32 %v1728, 2
    %vm1730 = vcmp.gt.s32.totalorder 0, %v1729
    %v1731 = vsel %vm1730, 0, %v1729
    %v1732 = vsub.s32 32, %v1731
    %v1733 = vshll.u32 %v1724, %v1731
    %v1734 = vshrl.u32 %v1716, %v1732
    %v1735 = vor.u32 %v1733, %v1734
    %v1736 = vsub.s32 4294967266, %v1731
    %v1737 = vadd.s32 %v1736, 127
    %v1738 = vshll.u32 %v1737, 23
    %v1739 = vor.u32 4788187, %v1738
    %v1740 = vand.u32 2147483647, %v1739
    %v1742 = vcvt.s32.f32 %v1735
    %v1743 = vmul.f32 %v1742, %v1740
    %v1744 = vxor.u32 %v1743, 2147483648
    %v1745 = vsel %vm1662, %v1744, %v1743
    %v1746 = vsub.s32 4, %v1722
    %v1747 = vsel %vm1662, %v1746, %v1722
    %v1748 = vsel %vm1661, %v1625, %v1745
    %v1749 = vsel %vm1661, 0, %v1747
    %v1750 = vcosq.f32.pop %v1748
    %v1751 = vsinq.f32.pop %v1748
    %vm1752 = vweird.f32 %v1625
    %v1753 = vadd.s32 %v1749, 3
    %v1754 = vand.u32 %v1753, 3
    %vm1755 = vcmp.lt.s32.totalorder %v1754, 2
    %vm1756 = vcmp.eq.s32.totalorder %v1754, 0
    %v1757 = vxor.u32 %v1751, 2147483648
    %v1758 = vsel %vm1756, %v1750, %v1757
    %vm1759 = vcmp.eq.s32.totalorder %v1754, 2
    %v1760 = vxor.u32 %v1750, 2147483648
    %v1761 = vsel %vm1759, %v1760, %v1751
    %v1762 = vsel %vm1755, %v1758, %v1761
    %v1763 = vsel %vm1752, nan, %v1762
    %v1765 = vcombine.high %v1763, %v1763
    %v1767 = vunpack.c.l.s4 1983009808
    %v1768 = vunpack.c.0.s8 %v1767
    %v1769 = vlaneseq
    %v1770 = vshrl.u32 %v1769, 7
    %v1771 = vsub.s32 %v1768, %v1770
    %v1772 = vrot.slane %v1763, %v1771
    %v1774 = vunpack.c.l.s4 1983009808
    %v1775 = vunpack.c.0.s8 %v1774
    %v1776 = vlaneseq
    %v1777 = vshrl.u32 %v1776, 7
    %v1778 = vsub.s32 %v1775, %v1777
    %v1779 = vrot.slane %v1765, %v1778
    %v1780 = vcombine.high %v1772, %v1772
    %v1781 = vcombine.high %v1779, %v1779
    %1782 = vrot.lane.b32.xlu0 %v1772, 38
    %v1783 = vpop.permute.xlu0 %1782
    %1784 = vrot.lane.b32.xlu0 %v1780, 38
    %v1785 = vpop.permute.xlu0 %1784
    %1786 = vrot.lane.b32.xlu0 %v1779, 38
    %v1787 = vpop.permute.xlu0 %1786
    %1788 = vrot.lane.b32.xlu0 %v1781, 38
    %v1789 = vpop.permute.xlu0 %1788
    %vm1794 = vcmask 435504
    %1795 = vst.msk [vmem:[#allocation5 + $0x2] sm:$0x3] %vm1794, %v1783
    %1796 = vst.msk [vmem:[#allocation5 + $0x8] sm:$0x3] %vm1794, %v1785
    %1797 = vst.msk [vmem:[#allocation5 + $0xe] sm:$0x3] %vm1794, %v1787
    %1798 = vst.msk [vmem:[#allocation5 + $0x14] sm:$0x3] %vm1794, %v1789
    %v1799 = vand.u32 2147483647, %v1625
    %vm1800 = vcmp.le.f32.partialorder %v1799, 0.7853982
    %vm1801 = vcmp.lt.s32.totalorder %v1625, 0
    %v1802 = vand.u32 %v1625, 2139095040
    %v1803 = vshrl.u32 %v1802, 23
    %v1804 = vsub.s32 %v1803, 127
    %v1805 = vand.u32 2147483647, %v1625
    %v1806 = vand.u32 %v1805, 8388607
    %v1807 = vor.u32 %v1806, 8388608
    %v1808 = vsub.s32 0, %v1807
    %v1809 = vadd.s32 %v1804, 1
    %vm1810 = vcmp.gt.s32.totalorder %v1809, 0
    %v1811 = vsel %vm1810, %v1809, 0
    %v1812 = vshrl.u32 %v1811, 5
    %v1813 = vand.u32 %v1811, 31
    %v1814 = vsub.s32 32, %v1813
    %v1815 = vshrl.u32 683565275, %v1814
    %v1816 = vshll.u32 683565275, %v1813
    %v1817 = vshrl.u32 2475754826, %v1814
    %v1818 = vor.u32 %v1816, %v1817
    %v1819 = vshll.u32 2475754826, %v1813
    %v1820 = vshrl.u32 2131351028, %v1814
    %v1821 = vor.u32 %v1819, %v1820
    %v1822 = vshll.u32 2131351028, %v1813
    %v1823 = vshrl.u32 2102212464, %v1814
    %v1824 = vor.u32 %v1822, %v1823
    %v1825 = vshll.u32 2102212464, %v1813
    %v1826 = vshrl.u32 920167782, %v1814
    %v1827 = vor.u32 %v1825, %v1826
    %v1828 = vshll.u32 920167782, %v1813
    %v1829 = vshrl.u32 1326507024, %v1814
    %v1830 = vor.u32 %v1828, %v1829
    %vm1831 = vcmp.lt.s32.totalorder %v1812, 1
    %vm1832 = vcmp.lt.s32.totalorder %v1812, 2
    %vm1833 = vcmp.lt.s32.totalorder %v1812, 3
    %vm1834 = vcmp.lt.s32.totalorder %v1812, 4
    %v1835 = vsel %vm1831, %v1815, %v1818
    %v1836 = vsel %vm1834, %v1824, 2102212464
    %v1837 = vsel %vm1833, %v1821, %v1836
    %v1838 = vsel %vm1832, %v1835, %v1837
    %v1839 = vsel %vm1831, %v1818, %v1821
    %v1840 = vsel %vm1834, %v1827, 920167782
    %v1841 = vsel %vm1833, %v1824, %v1840
    %v1842 = vsel %vm1832, %v1839, %v1841
    %v1843 = vsel %vm1831, %v1821, %v1824
    %v1844 = vsel %vm1834, %v1830, 1326507024
    %v1845 = vsel %vm1833, %v1827, %v1844
    %v1846 = vsel %vm1832, %v1843, %v1845
    %v1847 = vshll.u32 %v1807, 8
    %v1848 = vmul.u32.u64.compose %v1847, %v1846
    %v1849 = vextract.low.u32 %v1848
    %v1850 = vextract.high.u32 %v1848
    %v1851 = vmul.u32.u64.compose %v1847, %v1842
    %v1852 = vextract.low.u32 %v1851
    %v1853 = vextract.high.u32 %v1851
    %v1854 = vmul.u32 %v1847, %v1838
    %v1855 = vadd.s32 %v1850, %v1852
    %vm1856 = vc.u32 %v1850, %v1852
    %v1857 = vadd.s32 %v1853, 1
    %v1858 = vsel %vm1856, %v1857, %v1853
    %v1859 = vadd.s32 %v1854, %v1858
    %v1860 = vadd.s32 %v1859, 536870912
    %v1861 = vshrl.u32 %v1860, 30
    %v1862 = vshll.u32 %v1861, 30
    %v1863 = vsub.s32 %v1859, %v1862
    %vm1864 = vcmp.lt.s32.totalorder %v1863, 0
    %v1865 = vsub.s32 0, %v1863
    %v1866 = vsel %vm1864, %v1865, %v1863
    %v1867 = vclz %v1866
    %v1868 = vsub.s32 %v1867, 2
    %vm1869 = vcmp.gt.s32.totalorder 0, %v1868
    %v1870 = vsel %vm1869, 0, %v1868
    %v1871 = vsub.s32 32, %v1870
    %v1872 = vshll.u32 %v1863, %v1870
    %v1873 = vshrl.u32 %v1855, %v1871
    %v1874 = vor.u32 %v1872, %v1873
    %v1875 = vsub.s32 4294967266, %v1870
    %v1876 = vadd.s32 %v1875, 127
    %v1877 = vshll.u32 %v1876, 23
    %v1878 = vor.u32 4788187, %v1877
    %v1879 = vand.u32 2147483647, %v1878
    %v1881 = vcvt.s32.f32 %v1874
    %v1882 = vmul.f32 %v1881, %v1879
    %v1883 = vxor.u32 %v1882, 2147483648
    %v1884 = vsel %vm1801, %v1883, %v1882
    %v1885 = vsub.s32 4, %v1861
    %v1886 = vsel %vm1801, %v1885, %v1861
    %v1887 = vsel %vm1800, %v1625, %v1884
    %v1888 = vsel %vm1800, 0, %v1886
    %v1889 = vcosq.f32.pop %v1887
    %v1890 = vsinq.f32.pop %v1887
    %vm1891 = vweird.f32 %v1625
    %v1892 = vand.u32 %v1888, 3
    %vm1893 = vcmp.lt.s32.totalorder %v1892, 2
    %vm1894 = vcmp.eq.s32.totalorder %v1892, 0
    %v1895 = vxor.u32 %v1890, 2147483648
    %v1896 = vsel %vm1894, %v1889, %v1895
    %vm1897 = vcmp.eq.s32.totalorder %v1892, 2
    %v1898 = vxor.u32 %v1889, 2147483648
    %v1899 = vsel %vm1897, %v1898, %v1890
    %v1900 = vsel %vm1893, %v1896, %v1899
    %v1901 = vsel %vm1891, nan, %v1900
    %v1903 = vcombine.high %v1901, %v1901
    %v1905 = vunpack.c.l.s4 1983009808
    %v1906 = vunpack.c.0.s8 %v1905
    %v1907 = vlaneseq
    %v1908 = vshrl.u32 %v1907, 7
    %v1909 = vsub.s32 %v1906, %v1908
    %v1910 = vrot.slane %v1901, %v1909
    %v1912 = vunpack.c.l.s4 1983009808
    %v1913 = vunpack.c.0.s8 %v1912
    %v1914 = vlaneseq
    %v1915 = vshrl.u32 %v1914, 7
    %v1916 = vsub.s32 %v1913, %v1915
    %v1917 = vrot.slane %v1903, %v1916
    %v1918 = vcombine.high %v1910, %v1910
    %v1919 = vcombine.high %v1917, %v1917
    %1920 = vrot.lane.b32.xlu0 %v1910, 54
    %v1921 = vpop.permute.xlu0 %1920
    %1922 = vrot.lane.b32.xlu0 %v1918, 54
    %v1923 = vpop.permute.xlu0 %1922
    %1924 = vrot.lane.b32.xlu0 %v1917, 54
    %v1925 = vpop.permute.xlu0 %1924
    %1926 = vrot.lane.b32.xlu0 %v1919, 54
    %v1927 = vpop.permute.xlu0 %1926
    %vm1932 = vcmask 566704
    %1933 = vst.msk [vmem:[#allocation5 + $0x2] sm:$0x3] %vm1932, %v1921
    %1934 = vst.msk [vmem:[#allocation5 + $0x8] sm:$0x3] %vm1932, %v1923
    %1935 = vst.msk [vmem:[#allocation5 + $0xe] sm:$0x3] %vm1932, %v1925
    %1936 = vst.msk [vmem:[#allocation5 + $0x14] sm:$0x3] %vm1932, %v1927
    %v1937 = vld [vmem:[#allocation2] sm:$0xff]
    %1939 = vset.pattern.permute.xlu0 6
    %1940 = vperm.xlu0 %1939, %v1937
    %v1941 = vpop.permute.xlu0 %1940
    %v1943 = vmul.f32 %v1941, %v38
    %v1944 = vcombine.high %v1937, %v1937
    %v1946 = vunpack.c.l.s4 1983009808
    %v1947 = vunpack.c.0.s8 %v1946
    %v1948 = vlaneseq
    %v1949 = vshrl.u32 %v1948, 7
    %v1950 = vsub.s32 %v1947, %v1949
    %v1951 = vrot.slane %v1937, %v1950
    %v1953 = vunpack.c.l.s4 1983009808
    %v1954 = vunpack.c.0.s8 %v1953
    %v1955 = vlaneseq
    %v1956 = vshrl.u32 %v1955, 7
    %v1957 = vsub.s32 %v1954, %v1956
    %v1958 = vrot.slane %v1944, %v1957
    %v1959 = vcombine.high %v1951, %v1951
    %v1960 = vcombine.high %v1958, %v1958
    %1961 = vrot.lane.b32.xlu0 %v1951, 64
    %v1962 = vpop.permute.xlu0 %1961
    %1963 = vrot.lane.b32.xlu0 %v1959, 64
    %v1964 = vpop.permute.xlu0 %1963
    %1965 = vrot.lane.b32.xlu0 %v1958, 64
    %v1966 = vpop.permute.xlu0 %1965
    %1967 = vrot.lane.b32.xlu0 %v1960, 64
    %v1968 = vpop.permute.xlu0 %1967
    %vm1973 = vcmask 575024
    %1974 = vst.msk [vmem:[#allocation5 + $0x2] sm:$0x3] %vm1973, %v1962
    %1975 = vst.msk [vmem:[#allocation5 + $0x8] sm:$0x3] %vm1973, %v1964
    %1976 = vst.msk [vmem:[#allocation5 + $0xe] sm:$0x3] %vm1973, %v1966
    %1977 = vst.msk [vmem:[#allocation5 + $0x14] sm:$0x3] %vm1973, %v1968
    %v1978 = vand.u32 2147483647, %v1943
    %vm1979 = vcmp.le.f32.partialorder %v1978, 0.7853982
    %vm1980 = vcmp.lt.s32.totalorder %v1943, 0
    %v1981 = vand.u32 %v1943, 2139095040
    %v1982 = vshrl.u32 %v1981, 23
    %v1983 = vsub.s32 %v1982, 127
    %v1984 = vand.u32 2147483647, %v1943
    %v1985 = vand.u32 %v1984, 8388607
    %v1986 = vor.u32 %v1985, 8388608
    %v1987 = vsub.s32 0, %v1986
    %v1988 = vadd.s32 %v1983, 1
    %vm1989 = vcmp.gt.s32.totalorder %v1988, 0
    %v1990 = vsel %vm1989, %v1988, 0
    %v1991 = vshrl.u32 %v1990, 5
    %v1992 = vand.u32 %v1990, 31
    %v1993 = vsub.s32 32, %v1992
    %v1994 = vshrl.u32 683565275, %v1993
    %v1995 = vshll.u32 683565275, %v1992
    %v1996 = vshrl.u32 2475754826, %v1993
    %v1997 = vor.u32 %v1995, %v1996
    %v1998 = vshll.u32 2475754826, %v1992
    %v1999 = vshrl.u32 2131351028, %v1993
    %v2000 = vor.u32 %v1998, %v1999
    %v2001 = vshll.u32 2131351028, %v1992
    %v2002 = vshrl.u32 2102212464, %v1993
    %v2003 = vor.u32 %v2001, %v2002
    %v2004 = vshll.u32 2102212464, %v1992
    %v2005 = vshrl.u32 920167782, %v1993
    %v2006 = vor.u32 %v2004, %v2005
    %v2007 = vshll.u32 920167782, %v1992
    %v2008 = vshrl.u32 1326507024, %v1993
    %v2009 = vor.u32 %v2007, %v2008
    %vm2010 = vcmp.lt.s32.totalorder %v1991, 1
    %vm2011 = vcmp.lt.s32.totalorder %v1991, 2
    %vm2012 = vcmp.lt.s32.totalorder %v1991, 3
    %vm2013 = vcmp.lt.s32.totalorder %v1991, 4
    %v2014 = vsel %vm2010, %v1994, %v1997
    %v2015 = vsel %vm2013, %v2003, 2102212464
    %v2016 = vsel %vm2012, %v2000, %v2015
    %v2017 = vsel %vm2011, %v2014, %v2016
    %v2018 = vsel %vm2010, %v1997, %v2000
    %v2019 = vsel %vm2013, %v2006, 920167782
    %v2020 = vsel %vm2012, %v2003, %v2019
    %v2021 = vsel %vm2011, %v2018, %v2020
    %v2022 = vsel %vm2010, %v2000, %v2003
    %v2023 = vsel %vm2013, %v2009, 1326507024
    %v2024 = vsel %vm2012, %v2006, %v2023
    %v2025 = vsel %vm2011, %v2022, %v2024
    %v2026 = vshll.u32 %v1986, 8
    %v2027 = vmul.u32.u64.compose %v2026, %v2025
    %v2028 = vextract.low.u32 %v2027
    %v2029 = vextract.high.u32 %v2027
    %v2030 = vmul.u32.u64.compose %v2026, %v2021
    %v2031 = vextract.low.u32 %v2030
    %v2032 = vextract.high.u32 %v2030
    %v2033 = vmul.u32 %v2026, %v2017
    %v2034 = vadd.s32 %v2029, %v2031
    %vm2035 = vc.u32 %v2029, %v2031
    %v2036 = vadd.s32 %v2032, 1
    %v2037 = vsel %vm2035, %v2036, %v2032
    %v2038 = vadd.s32 %v2033, %v2037
    %v2039 = vadd.s32 %v2038, 536870912
    %v2040 = vshrl.u32 %v2039, 30
    %v2041 = vshll.u32 %v2040, 30
    %v2042 = vsub.s32 %v2038, %v2041
    %vm2043 = vcmp.lt.s32.totalorder %v2042, 0
    %v2044 = vsub.s32 0, %v2042
    %v2045 = vsel %vm2043, %v2044, %v2042
    %v2046 = vclz %v2045
    %v2047 = vsub.s32 %v2046, 2
    %vm2048 = vcmp.gt.s32.totalorder 0, %v2047
    %v2049 = vsel %vm2048, 0, %v2047
    %v2050 = vsub.s32 32, %v2049
    %v2051 = vshll.u32 %v2042, %v2049
    %v2052 = vshrl.u32 %v2034, %v2050
    %v2053 = vor.u32 %v2051, %v2052
    %v2054 = vsub.s32 4294967266, %v2049
    %v2055 = vadd.s32 %v2054, 127
    %v2056 = vshll.u32 %v2055, 23
    %v2057 = vor.u32 4788187, %v2056
    %v2058 = vand.u32 2147483647, %v2057
    %v2060 = vcvt.s32.f32 %v2053
    %v2061 = vmul.f32 %v2060, %v2058
    %v2062 = vxor.u32 %v2061, 2147483648
    %v2063 = vsel %vm1980, %v2062, %v2061
    %v2064 = vsub.s32 4, %v2040
    %v2065 = vsel %vm1980, %v2064, %v2040
    %v2066 = vsel %vm1979, %v1943, %v2063
    %v2067 = vsel %vm1979, 0, %v2065
    %v2068 = vcosq.f32.pop %v2066
    %v2069 = vsinq.f32.pop %v2066
    %vm2070 = vweird.f32 %v1943
    %v2071 = vadd.s32 %v2067, 3
    %v2072 = vand.u32 %v2071, 3
    %vm2073 = vcmp.lt.s32.totalorder %v2072, 2
    %vm2074 = vcmp.eq.s32.totalorder %v2072, 0
    %v2075 = vxor.u32 %v2069, 2147483648
    %v2076 = vsel %vm2074, %v2068, %v2075
    %vm2077 = vcmp.eq.s32.totalorder %v2072, 2
    %v2078 = vxor.u32 %v2068, 2147483648
    %v2079 = vsel %vm2077, %v2078, %v2069
    %v2080 = vsel %vm2073, %v2076, %v2079
    %v2081 = vsel %vm2070, nan, %v2080
    %v2083 = vcombine.high %v2081, %v2081
    %v2085 = vunpack.c.l.s4 1983009808
    %v2086 = vunpack.c.0.s8 %v2085
    %v2087 = vlaneseq
    %v2088 = vshrl.u32 %v2087, 7
    %v2089 = vsub.s32 %v2086, %v2088
    %v2090 = vrot.slane %v2081, %v2089
    %v2092 = vunpack.c.l.s4 1983009808
    %v2093 = vunpack.c.0.s8 %v2092
    %v2094 = vlaneseq
    %v2095 = vshrl.u32 %v2094, 7
    %v2096 = vsub.s32 %v2093, %v2095
    %v2097 = vrot.slane %v2083, %v2096
    %v2098 = vcombine.high %v2090, %v2090
    %v2099 = vcombine.high %v2097, %v2097
    %2100 = vrot.lane.b32.xlu0 %v2090, 71
    %v2101 = vpop.permute.xlu0 %2100
    %2102 = vrot.lane.b32.xlu0 %v2098, 71
    %v2103 = vpop.permute.xlu0 %2102
    %2104 = vrot.lane.b32.xlu0 %v2097, 71
    %v2105 = vpop.permute.xlu0 %2104
    %2106 = vrot.lane.b32.xlu0 %v2099, 71
    %v2107 = vpop.permute.xlu0 %2106
    %vm2112 = vcmask 706104
    %2113 = vst.msk [vmem:[#allocation5 + $0x2] sm:$0x3] %vm2112, %v2101
    %2114 = vst.msk [vmem:[#allocation5 + $0x8] sm:$0x3] %vm2112, %v2103
    %2115 = vst.msk [vmem:[#allocation5 + $0xe] sm:$0x3] %vm2112, %v2105
    %2116 = vst.msk [vmem:[#allocation5 + $0x14] sm:$0x3] %vm2112, %v2107
    %v2117 = vand.u32 2147483647, %v1943
    %vm2118 = vcmp.le.f32.partialorder %v2117, 0.7853982
    %vm2119 = vcmp.lt.s32.totalorder %v1943, 0
    %v2120 = vand.u32 %v1943, 2139095040
    %v2121 = vshrl.u32 %v2120, 23
    %v2122 = vsub.s32 %v2121, 127
    %v2123 = vand.u32 2147483647, %v1943
    %v2124 = vand.u32 %v2123, 8388607
    %v2125 = vor.u32 %v2124, 8388608
    %v2126 = vsub.s32 0, %v2125
    %v2127 = vadd.s32 %v2122, 1
    %vm2128 = vcmp.gt.s32.totalorder %v2127, 0
    %v2129 = vsel %vm2128, %v2127, 0
    %v2130 = vshrl.u32 %v2129, 5
    %v2131 = vand.u32 %v2129, 31
    %v2132 = vsub.s32 32, %v2131
    %v2133 = vshrl.u32 683565275, %v2132
    %v2134 = vshll.u32 683565275, %v2131
    %v2135 = vshrl.u32 2475754826, %v2132
    %v2136 = vor.u32 %v2134, %v2135
    %v2137 = vshll.u32 2475754826, %v2131
    %v2138 = vshrl.u32 2131351028, %v2132
    %v2139 = vor.u32 %v2137, %v2138
    %v2140 = vshll.u32 2131351028, %v2131
    %v2141 = vshrl.u32 2102212464, %v2132
    %v2142 = vor.u32 %v2140, %v2141
    %v2143 = vshll.u32 2102212464, %v2131
    %v2144 = vshrl.u32 920167782, %v2132
    %v2145 = vor.u32 %v2143, %v2144
    %v2146 = vshll.u32 920167782, %v2131
    %v2147 = vshrl.u32 1326507024, %v2132
    %v2148 = vor.u32 %v2146, %v2147
    %vm2149 = vcmp.lt.s32.totalorder %v2130, 1
    %vm2150 = vcmp.lt.s32.totalorder %v2130, 2
    %vm2151 = vcmp.lt.s32.totalorder %v2130, 3
    %vm2152 = vcmp.lt.s32.totalorder %v2130, 4
    %v2153 = vsel %vm2149, %v2133, %v2136
    %v2154 = vsel %vm2152, %v2142, 2102212464
    %v2155 = vsel %vm2151, %v2139, %v2154
    %v2156 = vsel %vm2150, %v2153, %v2155
    %v2157 = vsel %vm2149, %v2136, %v2139
    %v2158 = vsel %vm2152, %v2145, 920167782
    %v2159 = vsel %vm2151, %v2142, %v2158
    %v2160 = vsel %vm2150, %v2157, %v2159
    %v2161 = vsel %vm2149, %v2139, %v2142
    %v2162 = vsel %vm2152, %v2148, 1326507024
    %v2163 = vsel %vm2151, %v2145, %v2162
    %v2164 = vsel %vm2150, %v2161, %v2163
    %v2165 = vshll.u32 %v2125, 8
    %v2166 = vmul.u32.u64.compose %v2165, %v2164
    %v2167 = vextract.low.u32 %v2166
    %v2168 = vextract.high.u32 %v2166
    %v2169 = vmul.u32.u64.compose %v2165, %v2160
    %v2170 = vextract.low.u32 %v2169
    %v2171 = vextract.high.u32 %v2169
    %v2172 = vmul.u32 %v2165, %v2156
    %v2173 = vadd.s32 %v2168, %v2170
    %vm2174 = vc.u32 %v2168, %v2170
    %v2175 = vadd.s32 %v2171, 1
    %v2176 = vsel %vm2174, %v2175, %v2171
    %v2177 = vadd.s32 %v2172, %v2176
    %v2178 = vadd.s32 %v2177, 536870912
    %v2179 = vshrl.u32 %v2178, 30
    %v2180 = vshll.u32 %v2179, 30
    %v2181 = vsub.s32 %v2177, %v2180
    %vm2182 = vcmp.lt.s32.totalorder %v2181, 0
    %v2183 = vsub.s32 0, %v2181
    %v2184 = vsel %vm2182, %v2183, %v2181
    %v2185 = vclz %v2184
    %v2186 = vsub.s32 %v2185, 2
    %vm2187 = vcmp.gt.s32.totalorder 0, %v2186
    %v2188 = vsel %vm2187, 0, %v2186
    %v2189 = vsub.s32 32, %v2188
    %v2190 = vshll.u32 %v2181, %v2188
    %v2191 = vshrl.u32 %v2173, %v2189
    %v2192 = vor.u32 %v2190, %v2191
    %v2193 = vsub.s32 4294967266, %v2188
    %v2194 = vadd.s32 %v2193, 127
    %v2195 = vshll.u32 %v2194, 23
    %v2196 = vor.u32 4788187, %v2195
    %v2197 = vand.u32 2147483647, %v2196
    %v2199 = vcvt.s32.f32 %v2192
    %v2200 = vmul.f32 %v2199, %v2197
    %v2201 = vxor.u32 %v2200, 2147483648
    %v2202 = vsel %vm2119, %v2201, %v2200
    %v2203 = vsub.s32 4, %v2179
    %v2204 = vsel %vm2119, %v2203, %v2179
    %v2205 = vsel %vm2118, %v1943, %v2202
    %v2206 = vsel %vm2118, 0, %v2204
    %v2207 = vcosq.f32.pop %v2205
    %v2208 = vsinq.f32.pop %v2205
    %vm2209 = vweird.f32 %v1943
    %v2210 = vand.u32 %v2206, 3
    %vm2211 = vcmp.lt.s32.totalorder %v2210, 2
    %vm2212 = vcmp.eq.s32.totalorder %v2210, 0
    %v2213 = vxor.u32 %v2208, 2147483648
    %v2214 = vsel %vm2212, %v2207, %v2213
    %vm2215 = vcmp.eq.s32.totalorder %v2210, 2
    %v2216 = vxor.u32 %v2207, 2147483648
    %v2217 = vsel %vm2215, %v2216, %v2208
    %v2218 = vsel %vm2211, %v2214, %v2217
    %v2219 = vsel %vm2209, nan, %v2218
    %v2221 = vcombine.high %v2219, %v2219
    %v2223 = vunpack.c.l.s4 1983009808
    %v2224 = vunpack.c.0.s8 %v2223
    %v2225 = vlaneseq
    %v2226 = vshrl.u32 %v2225, 7
    %v2227 = vsub.s32 %v2224, %v2226
    %v2228 = vrot.slane %v2219, %v2227
    %v2230 = vunpack.c.l.s4 1983009808
    %v2231 = vunpack.c.0.s8 %v2230
    %v2232 = vlaneseq
    %v2233 = vshrl.u32 %v2232, 7
    %v2234 = vsub.s32 %v2231, %v2233
    %v2235 = vrot.slane %v2221, %v2234
    %v2236 = vcombine.high %v2228, %v2228
    %v2237 = vcombine.high %v2235, %v2235
    %2238 = vrot.lane.b32.xlu0 %v2228, 87
    %v2239 = vpop.permute.xlu0 %2238
    %2240 = vrot.lane.b32.xlu0 %v2236, 87
    %v2241 = vpop.permute.xlu0 %2240
    %2242 = vrot.lane.b32.xlu0 %v2235, 87
    %v2243 = vpop.permute.xlu0 %2242
    %2244 = vrot.lane.b32.xlu0 %v2237, 87
    %v2245 = vpop.permute.xlu0 %2244
    %vm2250 = vcmask 837304
    %2251 = vst.msk [vmem:[#allocation5 + $0x2] sm:$0x3] %vm2250, %v2239
    %2252 = vst.msk [vmem:[#allocation5 + $0x8] sm:$0x3] %vm2250, %v2241
    %2253 = vst.msk [vmem:[#allocation5 + $0xe] sm:$0x3] %vm2250, %v2243
    %2254 = vst.msk [vmem:[#allocation5 + $0x14] sm:$0x3] %vm2250, %v2245
    %v2255 = vld [vmem:[#allocation2] sm:$0xff]
    %2257 = vset.pattern.permute.xlu0 7
    %2258 = vperm.xlu0 %2257, %v2255
    %v2259 = vpop.permute.xlu0 %2258
    %v2261 = vmul.f32 %v2259, %v38
    %v2262 = vcombine.high %v2255, %v2255
    %v2264 = vunpack.c.l.s4 1983009808
    %v2265 = vunpack.c.0.s8 %v2264
    %v2266 = vlaneseq
    %v2267 = vshrl.u32 %v2266, 7
    %v2268 = vsub.s32 %v2265, %v2267
    %v2269 = vrot.slane %v2255, %v2268
    %v2271 = vunpack.c.l.s4 1983009808
    %v2272 = vunpack.c.0.s8 %v2271
    %v2273 = vlaneseq
    %v2274 = vshrl.u32 %v2273, 7
    %v2275 = vsub.s32 %v2272, %v2274
    %v2276 = vrot.slane %v2262, %v2275
    %v2277 = vcombine.high %v2269, %v2269
    %v2278 = vcombine.high %v2276, %v2276
    %2279 = vrot.lane.b32.xlu0 %v2269, 96
    %v2280 = vpop.permute.xlu0 %2279
    %2281 = vrot.lane.b32.xlu0 %v2277, 96
    %v2282 = vpop.permute.xlu0 %2281
    %2283 = vrot.lane.b32.xlu0 %v2276, 96
    %v2284 = vpop.permute.xlu0 %2283
    %2285 = vrot.lane.b32.xlu0 %v2278, 96
    %v2286 = vpop.permute.xlu0 %2285
    %vm2291 = vcmask 845624
    %2292 = vst.msk [vmem:[#allocation5 + $0x2] sm:$0x3] %vm2291, %v2280
    %2293 = vst.msk [vmem:[#allocation5 + $0x8] sm:$0x3] %vm2291, %v2282
    %2294 = vst.msk [vmem:[#allocation5 + $0xe] sm:$0x3] %vm2291, %v2284
    %2295 = vst.msk [vmem:[#allocation5 + $0x14] sm:$0x3] %vm2291, %v2286
    %v2296 = vand.u32 2147483647, %v2261
    %vm2297 = vcmp.le.f32.partialorder %v2296, 0.7853982
    %vm2298 = vcmp.lt.s32.totalorder %v2261, 0
    %v2299 = vand.u32 %v2261, 2139095040
    %v2300 = vshrl.u32 %v2299, 23
    %v2301 = vsub.s32 %v2300, 127
    %v2302 = vand.u32 2147483647, %v2261
    %v2303 = vand.u32 %v2302, 8388607
    %v2304 = vor.u32 %v2303, 8388608
    %v2305 = vsub.s32 0, %v2304
    %v2306 = vadd.s32 %v2301, 1
    %vm2307 = vcmp.gt.s32.totalorder %v2306, 0
    %v2308 = vsel %vm2307, %v2306, 0
    %v2309 = vshrl.u32 %v2308, 5
    %v2310 = vand.u32 %v2308, 31
    %v2311 = vsub.s32 32, %v2310
    %v2312 = vshrl.u32 683565275, %v2311
    %v2313 = vshll.u32 683565275, %v2310
    %v2314 = vshrl.u32 2475754826, %v2311
    %v2315 = vor.u32 %v2313, %v2314
    %v2316 = vshll.u32 2475754826, %v2310
    %v2317 = vshrl.u32 2131351028, %v2311
    %v2318 = vor.u32 %v2316, %v2317
    %v2319 = vshll.u32 2131351028, %v2310
    %v2320 = vshrl.u32 2102212464, %v2311
    %v2321 = vor.u32 %v2319, %v2320
    %v2322 = vshll.u32 2102212464, %v2310
    %v2323 = vshrl.u32 920167782, %v2311
    %v2324 = vor.u32 %v2322, %v2323
    %v2325 = vshll.u32 920167782, %v2310
    %v2326 = vshrl.u32 1326507024, %v2311
    %v2327 = vor.u32 %v2325, %v2326
    %vm2328 = vcmp.lt.s32.totalorder %v2309, 1
    %vm2329 = vcmp.lt.s32.totalorder %v2309, 2
    %vm2330 = vcmp.lt.s32.totalorder %v2309, 3
    %vm2331 = vcmp.lt.s32.totalorder %v2309, 4
    %v2332 = vsel %vm2328, %v2312, %v2315
    %v2333 = vsel %vm2331, %v2321, 2102212464
    %v2334 = vsel %vm2330, %v2318, %v2333
    %v2335 = vsel %vm2329, %v2332, %v2334
    %v2336 = vsel %vm2328, %v2315, %v2318
    %v2337 = vsel %vm2331, %v2324, 920167782
    %v2338 = vsel %vm2330, %v2321, %v2337
    %v2339 = vsel %vm2329, %v2336, %v2338
    %v2340 = vsel %vm2328, %v2318, %v2321
    %v2341 = vsel %vm2331, %v2327, 1326507024
    %v2342 = vsel %vm2330, %v2324, %v2341
    %v2343 = vsel %vm2329, %v2340, %v2342
    %v2344 = vshll.u32 %v2304, 8
    %v2345 = vmul.u32.u64.compose %v2344, %v2343
    %v2346 = vextract.low.u32 %v2345
    %v2347 = vextract.high.u32 %v2345
    %v2348 = vmul.u32.u64.compose %v2344, %v2339
    %v2349 = vextract.low.u32 %v2348
    %v2350 = vextract.high.u32 %v2348
    %v2351 = vmul.u32 %v2344, %v2335
    %v2352 = vadd.s32 %v2347, %v2349
    %vm2353 = vc.u32 %v2347, %v2349
    %v2354 = vadd.s32 %v2350, 1
    %v2355 = vsel %vm2353, %v2354, %v2350
    %v2356 = vadd.s32 %v2351, %v2355
    %v2357 = vadd.s32 %v2356, 536870912
    %v2358 = vshrl.u32 %v2357, 30
    %v2359 = vshll.u32 %v2358, 30
    %v2360 = vsub.s32 %v2356, %v2359
    %vm2361 = vcmp.lt.s32.totalorder %v2360, 0
    %v2362 = vsub.s32 0, %v2360
    %v2363 = vsel %vm2361, %v2362, %v2360
    %v2364 = vclz %v2363
    %v2365 = vsub.s32 %v2364, 2
    %vm2366 = vcmp.gt.s32.totalorder 0, %v2365
    %v2367 = vsel %vm2366, 0, %v2365
    %v2368 = vsub.s32 32, %v2367
    %v2369 = vshll.u32 %v2360, %v2367
    %v2370 = vshrl.u32 %v2352, %v2368
    %v2371 = vor.u32 %v2369, %v2370
    %v2372 = vsub.s32 4294967266, %v2367
    %v2373 = vadd.s32 %v2372, 127
    %v2374 = vshll.u32 %v2373, 23
    %v2375 = vor.u32 4788187, %v2374
    %v2376 = vand.u32 2147483647, %v2375
    %v2378 = vcvt.s32.f32 %v2371
    %v2379 = vmul.f32 %v2378, %v2376
    %v2380 = vxor.u32 %v2379, 2147483648
    %v2381 = vsel %vm2298, %v2380, %v2379
    %v2382 = vsub.s32 4, %v2358
    %v2383 = vsel %vm2298, %v2382, %v2358
    %v2384 = vsel %vm2297, %v2261, %v2381
    %v2385 = vsel %vm2297, 0, %v2383
    %v2386 = vcosq.f32.pop %v2384
    %v2387 = vsinq.f32.pop %v2384
    %vm2388 = vweird.f32 %v2261
    %v2389 = vadd.s32 %v2385, 3
    %v2390 = vand.u32 %v2389, 3
    %vm2391 = vcmp.lt.s32.totalorder %v2390, 2
    %vm2392 = vcmp.eq.s32.totalorder %v2390, 0
    %v2393 = vxor.u32 %v2387, 2147483648
    %v2394 = vsel %vm2392, %v2386, %v2393
    %vm2395 = vcmp.eq.s32.totalorder %v2390, 2
    %v2396 = vxor.u32 %v2386, 2147483648
    %v2397 = vsel %vm2395, %v2396, %v2387
    %v2398 = vsel %vm2391, %v2394, %v2397
    %v2399 = vsel %vm2388, nan, %v2398
    %v2401 = vcombine.high %v2399, %v2399
    %v2403 = vunpack.c.l.s4 1983009808
    %v2404 = vunpack.c.0.s8 %v2403
    %v2405 = vlaneseq
    %v2406 = vshrl.u32 %v2405, 7
    %v2407 = vsub.s32 %v2404, %v2406
    %v2408 = vrot.slane %v2399, %v2407
    %v2410 = vunpack.c.l.s4 1983009808
    %v2411 = vunpack.c.0.s8 %v2410
    %v2412 = vlaneseq
    %v2413 = vshrl.u32 %v2412, 7
    %v2414 = vsub.s32 %v2411, %v2413
    %v2415 = vrot.slane %v2401, %v2414
    %v2416 = vcombine.high %v2408, %v2408
    %v2417 = vcombine.high %v2415, %v2415
    %2418 = vrot.lane.b32.xlu0 %v2408, 104
    %v2419 = vpop.permute.xlu0 %2418
    %2420 = vrot.lane.b32.xlu0 %v2416, 104
    %v2421 = vpop.permute.xlu0 %2420
    %2422 = vrot.lane.b32.xlu0 %v2415, 104
    %v2423 = vpop.permute.xlu0 %2422
    %2424 = vrot.lane.b32.xlu0 %v2417, 104
    %v2425 = vpop.permute.xlu0 %2424
    %vm2430 = vcmask 976704
    %2431 = vst.msk [vmem:[#allocation5 + $0x2] sm:$0x3] %vm2430, %v2419
    %2432 = vst.msk [vmem:[#allocation5 + $0x8] sm:$0x3] %vm2430, %v2421
    %2433 = vst.msk [vmem:[#allocation5 + $0xe] sm:$0x3] %vm2430, %v2423
    %2434 = vst.msk [vmem:[#allocation5 + $0x14] sm:$0x3] %vm2430, %v2425
    %v2435 = vand.u32 2147483647, %v2261
    %vm2436 = vcmp.le.f32.partialorder %v2435, 0.7853982
    %vm2437 = vcmp.lt.s32.totalorder %v2261, 0
    %v2438 = vand.u32 %v2261, 2139095040
    %v2439 = vshrl.u32 %v2438, 23
    %v2440 = vsub.s32 %v2439, 127
    %v2441 = vand.u32 2147483647, %v2261
    %v2442 = vand.u32 %v2441, 8388607
    %v2443 = vor.u32 %v2442, 8388608
    %v2444 = vsub.s32 0, %v2443
    %v2445 = vadd.s32 %v2440, 1
    %vm2446 = vcmp.gt.s32.totalorder %v2445, 0
    %v2447 = vsel %vm2446, %v2445, 0
    %v2448 = vshrl.u32 %v2447, 5
    %v2449 = vand.u32 %v2447, 31
    %v2450 = vsub.s32 32, %v2449
    %v2451 = vshrl.u32 683565275, %v2450
    %v2452 = vshll.u32 683565275, %v2449
    %v2453 = vshrl.u32 2475754826, %v2450
    %v2454 = vor.u32 %v2452, %v2453
    %v2455 = vshll.u32 2475754826, %v2449
    %v2456 = vshrl.u32 2131351028, %v2450
    %v2457 = vor.u32 %v2455, %v2456
    %v2458 = vshll.u32 2131351028, %v2449
    %v2459 = vshrl.u32 2102212464, %v2450
    %v2460 = vor.u32 %v2458, %v2459
    %v2461 = vshll.u32 2102212464, %v2449
    %v2462 = vshrl.u32 920167782, %v2450
    %v2463 = vor.u32 %v2461, %v2462
    %v2464 = vshll.u32 920167782, %v2449
    %v2465 = vshrl.u32 1326507024, %v2450
    %v2466 = vor.u32 %v2464, %v2465
    %vm2467 = vcmp.lt.s32.totalorder %v2448, 1
    %vm2468 = vcmp.lt.s32.totalorder %v2448, 2
    %vm2469 = vcmp.lt.s32.totalorder %v2448, 3
    %vm2470 = vcmp.lt.s32.totalorder %v2448, 4
    %v2471 = vsel %vm2467, %v2451, %v2454
    %v2472 = vsel %vm2470, %v2460, 2102212464
    %v2473 = vsel %vm2469, %v2457, %v2472
    %v2474 = vsel %vm2468, %v2471, %v2473
    %v2475 = vsel %vm2467, %v2454, %v2457
    %v2476 = vsel %vm2470, %v2463, 920167782
    %v2477 = vsel %vm2469, %v2460, %v2476
    %v2478 = vsel %vm2468, %v2475, %v2477
    %v2479 = vsel %vm2467, %v2457, %v2460
    %v2480 = vsel %vm2470, %v2466, 1326507024
    %v2481 = vsel %vm2469, %v2463, %v2480
    %v2482 = vsel %vm2468, %v2479, %v2481
    %v2483 = vshll.u32 %v2443, 8
    %v2484 = vmul.u32.u64.compose %v2483, %v2482
    %v2485 = vextract.low.u32 %v2484
    %v2486 = vextract.high.u32 %v2484
    %v2487 = vmul.u32.u64.compose %v2483, %v2478
    %v2488 = vextract.low.u32 %v2487
    %v2489 = vextract.high.u32 %v2487
    %v2490 = vmul.u32 %v2483, %v2474
    %v2491 = vadd.s32 %v2486, %v2488
    %vm2492 = vc.u32 %v2486, %v2488
    %v2493 = vadd.s32 %v2489, 1
    %v2494 = vsel %vm2492, %v2493, %v2489
    %v2495 = vadd.s32 %v2490, %v2494
    %v2496 = vadd.s32 %v2495, 536870912
    %v2497 = vshrl.u32 %v2496, 30
    %v2498 = vshll.u32 %v2497, 30
    %v2499 = vsub.s32 %v2495, %v2498
    %vm2500 = vcmp.lt.s32.totalorder %v2499, 0
    %v2501 = vsub.s32 0, %v2499
    %v2502 = vsel %vm2500, %v2501, %v2499
    %v2503 = vclz %v2502
    %v2504 = vsub.s32 %v2503, 2
    %vm2505 = vcmp.gt.s32.totalorder 0, %v2504
    %v2506 = vsel %vm2505, 0, %v2504
    %v2507 = vsub.s32 32, %v2506
    %v2508 = vshll.u32 %v2499, %v2506
    %v2509 = vshrl.u32 %v2491, %v2507
    %v2510 = vor.u32 %v2508, %v2509
    %v2511 = vsub.s32 4294967266, %v2506
    %v2512 = vadd.s32 %v2511, 127
    %v2513 = vshll.u32 %v2512, 23
    %v2514 = vor.u32 4788187, %v2513
    %v2515 = vand.u32 2147483647, %v2514
    %v2517 = vcvt.s32.f32 %v2510
    %v2518 = vmul.f32 %v2517, %v2515
    %v2519 = vxor.u32 %v2518, 2147483648
    %v2520 = vsel %vm2437, %v2519, %v2518
    %v2521 = vsub.s32 4, %v2497
    %v2522 = vsel %vm2437, %v2521, %v2497
    %v2523 = vsel %vm2436, %v2261, %v2520
    %v2524 = vsel %vm2436, 0, %v2522
    %v2525 = vcosq.f32.pop %v2523
    %v2526 = vsinq.f32.pop %v2523
    %vm2527 = vweird.f32 %v2261
    %v2528 = vand.u32 %v2524, 3
    %vm2529 = vcmp.lt.s32.totalorder %v2528, 2
    %vm2530 = vcmp.eq.s32.totalorder %v2528, 0
    %v2531 = vxor.u32 %v2526, 2147483648
    %v2532 = vsel %vm2530, %v2525, %v2531
    %vm2533 = vcmp.eq.s32.totalorder %v2528, 2
    %v2534 = vxor.u32 %v2525, 2147483648
    %v2535 = vsel %vm2533, %v2534, %v2526
    %v2536 = vsel %vm2529, %v2532, %v2535
    %v2537 = vsel %vm2527, nan, %v2536
    %v2539 = vcombine.high %v2537, %v2537
    %v2541 = vunpack.c.l.s4 1983009808
    %v2542 = vunpack.c.0.s8 %v2541
    %v2543 = vlaneseq
    %v2544 = vshrl.u32 %v2543, 7
    %v2545 = vsub.s32 %v2542, %v2544
    %v2546 = vrot.slane %v2537, %v2545
    %v2548 = vunpack.c.l.s4 1983009808
    %v2549 = vunpack.c.0.s8 %v2548
    %v2550 = vlaneseq
    %v2551 = vshrl.u32 %v2550, 7
    %v2552 = vsub.s32 %v2549, %v2551
    %v2553 = vrot.slane %v2539, %v2552
    %v2554 = vcombine.high %v2546, %v2546
    %v2555 = vcombine.high %v2553, %v2553
    %2556 = vrot.lane.b32.xlu0 %v2546, 120
    %v2557 = vpop.permute.xlu0 %2556
    %2558 = vrot.lane.b32.xlu0 %v2554, 120
    %v2559 = vpop.permute.xlu0 %2558
    %2560 = vrot.lane.b32.xlu0 %v2553, 120
    %v2561 = vpop.permute.xlu0 %2560
    %2562 = vrot.lane.b32.xlu0 %v2555, 120
    %v2563 = vpop.permute.xlu0 %2562
    %v2564 = vrot.slane %v2557, 6
    %v2565 = vrot.slane %v2559, 6
    %v2566 = vrot.slane %v2561, 6
    %v2567 = vrot.slane %v2563, 6
    %vm2568 = vcmask 982016
    %v2569 = vsel %vm2568, %v2564, %v2557
    %v2570 = vsel %vm2568, %v2565, %v2559
    %v2571 = vsel %vm2568, %v2566, %v2561
    %v2572 = vsel %vm2568, %v2567, %v2563
    %vm2577 = vcmask 1042368
    %vm2578 = vcmask 60418
    %vm2579 = vmor %vm2578, %vm2577
    %2580 = vst.msk [vmem:[#allocation5 + $0x2] sm:$0xf] %vm2579, %v2569
    %2581 = vst.msk [vmem:[#allocation5 + $0x8] sm:$0xf] %vm2579, %v2570
    %2582 = vst.msk [vmem:[#allocation5 + $0xe] sm:$0xf] %vm2579, %v2571
    %2583 = vst.msk [vmem:[#allocation5 + $0x14] sm:$0xf] %vm2579, %v2572
    // Predicated region
    $region14: #{tpu_custom_call.1} parent=1 // pred_check
      _
    $region15: #{tpu_custom_call.1} parent=1 // pred_check_branch
      %2585 = sbr.rel (0) target = $region17
    $region16: #{tpu_custom_call.1} parent=1 // pred_region
      %s2587 = ssub.s32 384, 96
      %2588 = vsyncadd [#allocation4], %s2587
      %s2589 = sshll.u32 [#allocation5], 4
      %s2590 = int_to_ptr.vmem [resolvable:$true] %s2589
      %2595 = dma.vmem_to_hbm [thread:$0]  %s2590, 96, %s2, [#allocation4], 96, 96, 6
    $region17: #{tpu_custom_call.1} parent=1 // pred_fallthru
      _
    // Predicated region
    $region18: #{tpu_custom_call.1} parent=1 // pred_check
      _
    $region19: #{tpu_custom_call.1} parent=1 // pred_check_branch
      %2597 = sbr.rel (0) target = $region21
    $region20: #{tpu_custom_call.1} parent=1 // pred_region
      %2598 = dma.done [#allocation4], 384
    $region21: #{tpu_custom_call.1} parent=1 // pred_fallthru
      _
    %2599 = vsyncpa [#allocation3], 1
    %2600 = vsyncpa [#allocation4], 1

</llo_original>
